<compile_context>
chip_gen: v7x
topology: tpu7x:2x2x1
jax: 0.10.0
libtpu: 0.0.40
codegen_flags: <defaults>
</compile_context>

<pallas_src>
import functools

import jax
import jax.numpy as jnp
from jax.experimental import pallas as pl
from jax.experimental.pallas import tpu as pltpu

_HIGHEST = jax.lax.Precision.HIGHEST


def _attention_kernel(gamma_ref,          # SMEM scalar (1,)
                      x_ref,              # (block_b*N, H) VMEM
                      w_qkv_ref,          # (H, 2*Kd+H)    VMEM (fused weights)
                      b_qkv_ref,          # (1, 2*Kd+H)    VMEM (fused biases)
                      o_ref,              # (block_b*N, H) VMEM
                      *, block_b, seq_n, key_dim, hidden_dim):
    x = x_ref[...]                                            # (block_b*N, H)

    # Single fused QKV projection: one MXU push over all rows and 2Kd+H cols.
    qkv = jnp.dot(x, w_qkv_ref[...],
                  preferred_element_type=jnp.float32,
                  precision=_HIGHEST) + b_qkv_ref[...]        # (rows, 2Kd+H)

    # Slice q/k/v once; fold the per-graph loop into dot_general batch dims
    # (N == 8 is exactly one sublane tile, so this reshape is a cheap view).
    q = qkv[:, :key_dim].reshape(block_b, seq_n, key_dim)
    k = qkv[:, key_dim:2 * key_dim].reshape(block_b, seq_n, key_dim)
    v = qkv[:, 2 * key_dim:].reshape(block_b, seq_n, hidden_dim)

    # Batched Q @ K^T without materializing a transpose of K.
    s = jnp.einsum("bqd,bkd->bqk", q, k,
                   preferred_element_type=jnp.float32,
                   precision=_HIGHEST)                        # (block_b, N, N)

    # Exact softmax (no approx reciprocal -- matches the reference numerics).
    m = jnp.max(s, axis=-1, keepdims=True)
    p = jnp.exp(s - m)
    p = p / jnp.sum(p, axis=-1, keepdims=True)

    out = jnp.einsum("bqk,bkd->bqd", p, v,
                     preferred_element_type=jnp.float32,
                     precision=_HIGHEST)                      # (block_b, N, H)

    gamma = gamma_ref[0]
    res = gamma * out + x.reshape(block_b, seq_n, hidden_dim)
    o_ref[...] = res.reshape(block_b * seq_n, hidden_dim).astype(o_ref.dtype)


def prepare_attention_params(params):
    """One-time parameter prep (hoisted out of the per-call path).

    PyTorch Linear weights are (out_features, in_features); pre-transpose and
    fuse Q/K/V into a single (H, 2*Kd + H) matrix so the kernel does one
    row-major x @ W_qkv matmul on the MXU.
    """
    kd = params["wq"].shape[0]
    h = params["wv"].shape[0]
    w_qkv = jnp.concatenate(
        [params["wq"].T, params["wk"].T, params["wv"].T], axis=1)     # (H, 2Kd+H)
    b_qkv = jnp.concatenate(
        [params["bq"], params["bk"], params["bv"]]).reshape(1, 2 * kd + h)
    gamma = jnp.reshape(params["gamma"], (1,)).astype(jnp.float32)
    return {"w_qkv": w_qkv, "b_qkv": b_qkv, "gamma": gamma,
            "key_dim": kd, "hidden_dim": h}


def _default_num_batch_blocks(batch, seq_n):
    """Split across the two v7x TensorCores only when each core gets at least
    one full ~256-row MXU pass; otherwise keep a single fat grid step."""
    try:
        kind = jax.devices()[0].device_kind.lower()
    except Exception:
        kind = ""
    if "v7" in kind and batch % 2 == 0 and (batch // 2) * seq_n >= 256:
        return 2
    return 1


def attention_forward(x, prepared, num_batch_blocks=None):
    """x: (B, N, H) float32. prepared: output of prepare_attention_params."""
    B, N, H = x.shape
    kd = prepared["key_dim"]
    qkv_cols = 2 * kd + H

    n_blocks = num_batch_blocks or _default_num_batch_blocks(B, N)
    if B % n_blocks:
        n_blocks = 1
    block_b = B // n_blocks
    rows = block_b * N

    # Flatten the batch wrapper-side so each grid step is one fat 2-D tile.
    x2d = x.reshape(B * N, H)

    flops = (2 * B * N * H * qkv_cols        # fused QKV projection
             + 2 * B * N * N * kd            # Q @ K^T
             + 2 * B * N * N * H             # A @ V
             + 5 * B * N * N + 2 * B * N * H)
    bytes_accessed = (2 * B * N * H * 4      # x in + out
                      + H * qkv_cols * 4 + qkv_cols * 4 + 4)
    cost = pl.CostEstimate(flops=flops,
                           transcendentals=B * N * N,
                           bytes_accessed=bytes_accessed)

    kernel = functools.partial(_attention_kernel,
                               block_b=block_b, seq_n=N,
                               key_dim=kd, hidden_dim=H)

    out2d = pl.pallas_call(
        kernel,
        out_shape=jax.ShapeDtypeStruct((B * N, H), x.dtype),
        grid=(n_blocks,),
        in_specs=[
            pl.BlockSpec(memory_space=pltpu.MemorySpace.SMEM),      # gamma
            pl.BlockSpec((rows, H), lambda g: (g, 0)),              # x rows
            pl.BlockSpec((H, qkv_cols), lambda g: (0, 0)),          # fused W_qkv
            pl.BlockSpec((1, qkv_cols), lambda g: (0, 0)),          # fused b_qkv
        ],
        out_specs=pl.BlockSpec((rows, H), lambda g: (g, 0)),
        compiler_params=pltpu.CompilerParams(
            dimension_semantics=("parallel",)),
        cost_estimate=cost,
    )(prepared["gamma"], x2d, prepared["w_qkv"], prepared["b_qkv"])

    return out2d.reshape(B, N, H)


def _reference(x, params):
    """Pure-JAX reference mirroring the PyTorch forward (full f32 precision)."""
    q = jnp.einsum("bnh,kh->bnk", x, params["wq"], precision=_HIGHEST) + params["bq"]
    k = jnp.einsum("bnh,kh->bnk", x, params["wk"], precision=_HIGHEST) + params["bk"]
    v = jnp.einsum("bnh,kh->bnk", x, params["wv"], precision=_HIGHEST) + params["bv"]
    s = jnp.einsum("bik,bjk->bij", q, k, precision=_HIGHEST)
    a = jax.nn.softmax(s, axis=-1)
    out = jnp.einsum("bij,bjk->bik", a, v, precision=_HIGHEST)
    return params["gamma"] * out + x


if __name__ == "__main__":
    B, N, H = 2, 8, 32          # batch, seq/nodes, hidden_dim
    KEY_DIM = 32

    key = jax.random.PRNGKey(0)
    k_x, k_wq, k_bq, k_wk, k_bk, k_wv, k_bv = jax.random.split(key, 7)

    x = jax.random.normal(k_x, (B, N, H), dtype=jnp.float32)

    # Deterministic params (PyTorch Linear shapes: weight (out, in), bias (out,)).
    params = {
        "wq": jax.random.normal(k_wq, (KEY_DIM, H), dtype=jnp.float32) * 0.1,
        "bq": jax.random.normal(k_bq, (KEY_DIM,), dtype=jnp.float32) * 0.1,
        "wk": jax.random.normal(k_wk, (KEY_DIM, H), dtype=jnp.float32) * 0.1,
        "bk": jax.random.normal(k_bk, (KEY_DIM,), dtype=jnp.float32) * 0.1,
        "wv": jax.random.normal(k_wv, (H, H), dtype=jnp.float32) * 0.1,
        "bv": jax.random.normal(k_bv, (H,), dtype=jnp.float32) * 0.1,
        # nn.Parameter(torch.zeros(1)) -> gamma starts at 0; use a nonzero value
        # so the attention path is actually exercised numerically.
        "gamma": jnp.asarray(0.5, dtype=jnp.float32),
    }

    prepared = prepare_attention_params(params)     # hoisted one-time prep

    out = attention_forward(x, prepared)
    out = jax.block_until_ready(out)

    ref = _reference(x, params)
    assert out.shape == (B, N, H)
    assert jnp.allclose(out, ref, atol=1e-4, rtol=1e-4), "mismatch vs reference"

    print("KERNEL_OK")
</pallas_src>

<mosaic_0001>
module attributes {stable_mosaic.version = 11 : i64} {
  func.func @_attention_kernel(%arg0: i32, %arg1: memref<1xf32, #tpu.memory_space<smem>>, %arg2: memref<16x32xf32, #tpu.memory_space<vmem>>, %arg3: memref<32x96xf32, #tpu.memory_space<vmem>>, %arg4: memref<1x96xf32, #tpu.memory_space<vmem>>, %arg5: memref<16x32xf32, #tpu.memory_space<vmem>>) attributes {dimension_semantics = [#tpu.dimension_semantics<parallel>], iteration_bounds = array<i64: 1>, scalar_prefetch = 0 : i64, scratch_operands = 0 : i64, tpu.core_type = #tpu.core_type<tc>, window_params = [{transform_indices = @transform_0, window_bounds = array<i64: 1>}, {transform_indices = @transform_1, window_bounds = array<i64: 16, 32>}, {pipeline_mode = #tpu.pipeline_mode<synchronous>, transform_indices = @transform_2, window_bounds = array<i64: 32, 96>}, {pipeline_mode = #tpu.pipeline_mode<synchronous>, transform_indices = @transform_3, window_bounds = array<i64: 1, 96>}, {transform_indices = @transform_4, window_bounds = array<i64: 16, 32>}]} {
    %c0 = arith.constant 0 : index
    %c0_0 = arith.constant 0 : index
    %0 = vector.load %arg2[%c0, %c0_0] : memref<16x32xf32, #tpu.memory_space<vmem>>, vector<16x32xf32>
    %c0_1 = arith.constant 0 : index
    %c0_2 = arith.constant 0 : index
    %1 = vector.load %arg3[%c0_1, %c0_2] : memref<32x96xf32, #tpu.memory_space<vmem>>, vector<32x96xf32>
    %cst = arith.constant dense<0.000000e+00> : vector<16x96xf32>
    %2 = tpu.matmul %0, %1, %cst {dimension_numbers = #tpu.dot_dimension_numbers<[1], [0], [0], [1], [0, 0, 1, 1], [], []>, precision = #tpu.contract_precision<fp32>} : vector<16x32xf32>, vector<32x96xf32>, vector<16x96xf32> -> vector<16x96xf32>
    %c0_3 = arith.constant 0 : index
    %c0_4 = arith.constant 0 : index
    %3 = vector.load %arg4[%c0_3, %c0_4] : memref<1x96xf32, #tpu.memory_space<vmem>>, vector<1x96xf32>
    %4 = vector.broadcast %3 : vector<1x96xf32> to vector<16x96xf32>
    %5 = arith.addf %2, %4 : vector<16x96xf32>
    %6 = vector.extract_strided_slice %5 {offsets = [0, 0], sizes = [16, 32], strides = [1, 1]} : vector<16x96xf32> to vector<16x32xf32>
    %7 = vector.shape_cast %6 : vector<16x32xf32> to vector<2x8x32xf32>
    %8 = vector.extract_strided_slice %5 {offsets = [0, 32], sizes = [16, 32], strides = [1, 1]} : vector<16x96xf32> to vector<16x32xf32>
    %9 = vector.shape_cast %8 : vector<16x32xf32> to vector<2x8x32xf32>
    %10 = vector.extract_strided_slice %5 {offsets = [0, 64], sizes = [16, 32], strides = [1, 1]} : vector<16x96xf32> to vector<16x32xf32>
    %11 = vector.shape_cast %10 : vector<16x32xf32> to vector<2x8x32xf32>
    "tpu.trace_start"() <{level = 10 : i32, message = "bqd,bkd->bqk"}> : () -> ()
    %cst_5 = arith.constant dense<0.000000e+00> : vector<2x8x8xf32>
    %12 = tpu.matmul %7, %9, %cst_5 {dimension_numbers = #tpu.dot_dimension_numbers<[2], [2], [1], [1], [0, 0, 0, 1, 1, 1], [0], [0]>, precision = #tpu.contract_precision<fp32>} : vector<2x8x32xf32>, vector<2x8x32xf32>, vector<2x8x8xf32> -> vector<2x8x8xf32>
    "tpu.trace_stop"() : () -> ()
    %cst_6 = arith.constant dense<0xFF800000> : vector<2x8xf32>
    %13 = vector.multi_reduction <maximumf>, %12, %cst_6 [2] : vector<2x8x8xf32> to vector<2x8xf32>
    %14 = vector.shape_cast %13 : vector<2x8xf32> to vector<2x8x1xf32>
    %15 = vector.broadcast %14 : vector<2x8x1xf32> to vector<2x8x8xf32>
    %16 = arith.subf %12, %15 : vector<2x8x8xf32>
    %17 = math.exp %16 : vector<2x8x8xf32>
    %cst_7 = arith.constant dense<0.000000e+00> : vector<2x8xf32>
    %18 = vector.multi_reduction <add>, %17, %cst_7 [2] : vector<2x8x8xf32> to vector<2x8xf32>
    %19 = vector.shape_cast %18 : vector<2x8xf32> to vector<2x8x1xf32>
    %20 = vector.broadcast %19 : vector<2x8x1xf32> to vector<2x8x8xf32>
    %21 = arith.divf %17, %20 : vector<2x8x8xf32>
    "tpu.trace_start"() <{level = 10 : i32, message = "bqk,bkd->bqd"}> : () -> ()
    %cst_8 = arith.constant dense<0.000000e+00> : vector<2x8x32xf32>
    %22 = tpu.matmul %21, %11, %cst_8 {dimension_numbers = #tpu.dot_dimension_numbers<[2], [1], [1], [2], [0, 0, 0, 1, 1, 2], [0], [0]>, precision = #tpu.contract_precision<fp32>} : vector<2x8x8xf32>, vector<2x8x32xf32>, vector<2x8x32xf32> -> vector<2x8x32xf32>
    "tpu.trace_stop"() : () -> ()
    %c0_9 = arith.constant 0 : index
    %23 = memref.load %arg1[%c0_9] : memref<1xf32, #tpu.memory_space<smem>>
    %24 = vector.broadcast %23 : f32 to vector<2x8x32xf32>
    %25 = arith.mulf %24, %22 : vector<2x8x32xf32>
    %26 = vector.shape_cast %0 : vector<16x32xf32> to vector<2x8x32xf32>
    %27 = arith.addf %25, %26 : vector<2x8x32xf32>
    %28 = vector.shape_cast %27 : vector<2x8x32xf32> to vector<16x32xf32>
    %c0_10 = arith.constant 0 : index
    %c0_11 = arith.constant 0 : index
    %29 = vector.load %arg5[%c0_10, %c0_11] : memref<16x32xf32, #tpu.memory_space<vmem>>, vector<16x32xf32>
    tpu.vector_store %arg5[%c0_10, %c0_11], %28 {strides = array<i32>} : memref<16x32xf32, #tpu.memory_space<vmem>>, vector<16x32xf32>,
    return
  }
  func.func @transform_0(%arg0: i32) -> i32 {
    %c0_i32 = arith.constant 0 : i32
    %c0_i32_0 = arith.constant 0 : i32
    return %c0_i32 : i32
  }
  func.func @transform_1(%arg0: i32) -> (i32, i32) {
    %c0_i32 = arith.constant 0 : i32
    %c0_i32_0 = arith.constant 0 : i32
    return %arg0, %c0_i32 : i32, i32
  }
  func.func @transform_2(%arg0: i32) -> (i32, i32) {
    %c0_i32 = arith.constant 0 : i32
    %c0_i32_0 = arith.constant 0 : i32
    %c0_i32_1 = arith.constant 0 : i32
    return %c0_i32, %c0_i32_0 : i32, i32
  }
  func.func @transform_3(%arg0: i32) -> (i32, i32) {
    %c0_i32 = arith.constant 0 : i32
    %c0_i32_0 = arith.constant 0 : i32
    %c0_i32_1 = arith.constant 0 : i32
    return %c0_i32, %c0_i32_0 : i32, i32
  }
  func.func @transform_4(%arg0: i32) -> (i32, i32) {
    %c0_i32 = arith.constant 0 : i32
    %c0_i32_0 = arith.constant 0 : i32
    return %arg0, %c0_i32 : i32, i32
  }
}

</mosaic_0001>

<llo_original>
// kernel: tpu_custom_call.1
$region0: #{tpu_custom_call.1}
  #allocation0 [shape = 'u32[]', space=smem, size = 0x4, offset = 0x4, fixed_abs, tag = 'smem constant byte address 0x4 - core index']
  #allocation1 [shape = 'u32[144,128]{1,0:T(1,128)}', space=vmem, size = 0x12000, scoped, tag = 'internal scratch']
  #allocation2 [shape = 'f32[1]{0:T(128)S(6)}', space=smem, size = 0x200, scoped, tag = 'scoped memory for tpu_custom_call.1']
  %s0 = inlined_call_operand.<no memory space> [shape: f32[1], index: 0, kind: input, shape index: {}]
  %s1 = inlined_call_operand.hbm [shape: f32[16,32], index: 1, kind: input, shape index: {}]
  %s2 = inlined_call_operand.hbm [shape: f32[32,96], index: 2, kind: input, shape index: {}]
  %s3 = inlined_call_operand.vmem [shape: f32[1,96], index: 3, kind: input, shape index: {}]
  %s4 = inlined_call_operand.hbm [shape: f32[16,32], index: 4, kind: output, shape index: {}]
  %s5 = sld [smem:[#allocation0]]
  $region34: #{tpu_custom_call.1} parent=0
    _
  %s7 = ssub.s32 1, %s5
  %s8 = scalar_select 0, %s7, %s5
  %9 = sst [smem:[#allocation2]] %s0
  $region1: #{tpu_custom_call.1} parent=0
    #allocation3 [shape = 'u8[8192]{0}', space=vmem, size = 0x2000, scoped, tag = 'input window, operand 1, single buffered']
    #allocation4 [shape = 's32[1]{0}', space=sflag, size = 0x4, scoped, tag = 'scoped memory for tpu_custom_call.1']
    #allocation5 [shape = 's32[1]{0}', space=sflag, size = 0x4, scoped, tag = 'scoped memory for tpu_custom_call.1']
    #allocation6 [shape = 'u8[16384]{0}', space=vmem, size = 0x4000, scoped, tag = 'input window, operand 2, single buffered']
    #allocation7 [shape = 's32[1]{0}', space=sflag, size = 0x4, scoped, tag = 'scoped memory for tpu_custom_call.1']
    #allocation8 [shape = 'u8[8192]{0}', space=vmem, size = 0x2000, scoped, tag = 'output window, operand 0, single buffered']
    %10 = vsyncpa [#allocation4], 0
    %11 = vsyncpa [#allocation7], 0
    %12 = vsyncpa [#allocation5], 0
    // Predicated region
    $region2: #{tpu_custom_call.1} parent=1 // pred_check
      _
    $region3: #{tpu_custom_call.1} parent=1 // pred_check_branch
      %14 = sbr.rel (0) target = $region5
    $region4: #{tpu_custom_call.1} parent=1 // pred_region
      _
    $region5: #{tpu_custom_call.1} parent=1 // pred_fallthru
      _
    // Predicated region
    $region6: #{tpu_custom_call.1} parent=1 // pred_check
      _
    $region7: #{tpu_custom_call.1} parent=1 // pred_check_branch
      %16 = sbr.rel (0) target = $region9
    $region8: #{tpu_custom_call.1} parent=1 // pred_region
      %s18 = ssub.s32 256, 256
      %19 = vsyncadd [#allocation4], %s18
      %s20 = sshll.u32 [#allocation3], 4
      %s21 = int_to_ptr.vmem [resolvable:$true] %s20
      %26 = dma.hbm_to_vmem [thread:$0]  %s1, 256, %s21, [#allocation4], 128, 128, 8
    $region9: #{tpu_custom_call.1} parent=1 // pred_fallthru
      _
    // Predicated region
    $region10: #{tpu_custom_call.1} parent=1 // pred_check
      _
    $region11: #{tpu_custom_call.1} parent=1 // pred_check_branch
      %28 = sbr.rel (0) target = $region13
    $region12: #{tpu_custom_call.1} parent=1 // pred_region
      %s30 = ssub.s32 512, 512
      %31 = vsyncadd [#allocation7], %s30
      %s32 = sshll.u32 [#allocation6], 4
      %s33 = int_to_ptr.vmem [resolvable:$true] %s32
      %38 = dma.hbm_to_vmem [thread:$0]  %s2, 512, %s33, [#allocation7], 128, 128, 8
    $region13: #{tpu_custom_call.1} parent=1 // pred_fallthru
      _
    // Predicated region
    $region14: #{tpu_custom_call.1} parent=1 // pred_check
      _
    $region15: #{tpu_custom_call.1} parent=1 // pred_check_branch
      %40 = sbr.rel (0) target = $region17
    $region16: #{tpu_custom_call.1} parent=1 // pred_region
      _
    $region17: #{tpu_custom_call.1} parent=1 // pred_fallthru
      _
    // Predicated region
    $region18: #{tpu_custom_call.1} parent=1 // pred_check
      _
    $region19: #{tpu_custom_call.1} parent=1 // pred_check_branch
      %42 = sbr.rel (0) target = $region21
    $region20: #{tpu_custom_call.1} parent=1 // pred_region
      %43 = dma.done [#allocation4], 256
    $region21: #{tpu_custom_call.1} parent=1 // pred_fallthru
      _
    // Predicated region
    $region22: #{tpu_custom_call.1} parent=1 // pred_check
      _
    $region23: #{tpu_custom_call.1} parent=1 // pred_check_branch
      %45 = sbr.rel (0) target = $region25
    $region24: #{tpu_custom_call.1} parent=1 // pred_region
      %46 = dma.done [#allocation7], 512
    $region25: #{tpu_custom_call.1} parent=1 // pred_fallthru
      _
    %v47 = vld [vmem:[#allocation3] sm:$0xff]
    %v48 = vld [vmem:[#allocation3 + $0x8] sm:$0xff]
    %v49 = vld [vmem:[#allocation6] sm:$0xff]
    %v50 = vld [vmem:[#allocation6 + $0x8] sm:$0xff]
    %v51 = vld [vmem:[#allocation6 + $0x10] sm:$0xff]
    %v52 = vld [vmem:[#allocation6 + $0x18] sm:$0xff]
    %v53 = vld [vmem:[%s3] sm:$0x1]
    %v55 = vlaneseq
    %v56 = vshrl.u32 %v55, 7
    %v57 = vsub.s32 0, %v56
    %v58 = vrot.slane %v53, %v57
    %vm60 = vcmask 261120
    %v62 = vsel %vm60, %v47, 0
    %v65 = vsel %vm60, %v48, 0
    %67 = vmatprep.subr.mxu0 0.0
    %v68 = vand.u32 %v49, 4294901760
    %69 = vmatpush1.msra.mxu0 %v68
    %70 = vmatprep.subr.mxu0 0.0
    %v71 = vand.u32 %v50, 4294901760
    %72 = vmatpush1.msra.mxu0 %v71
    %73 = vmatprep.subr.mxu0 0.0
    %v74 = vand.u32 %v51, 4294901760
    %75 = vmatpush1.msra.mxu0 %v74
    %76 = vmatprep.subr.mxu0 0.0
    %v77 = vand.u32 %v52, 4294901760
    %78 = vmatpush1.msra.mxu0 %v77
    %79 = vmatprep.subr.mxu0 0.0
    %80 = vmatpush1.msra.mxu0 0.0
    %81 = vmatprep.subr.mxu0 0.0
    %82 = vmatpush1.msra.mxu0 0.0
    %83 = vmatprep.subr.mxu0 0.0
    %84 = vmatpush1.msra.mxu0 0.0
    %85 = vmatprep.subr.mxu0 0.0
    %86 = vmatpush1.msra.mxu0 0.0
    %87 = vmatprep.subr.mxu0 0.0
    %88 = vmatpush1.msra.mxu0 0.0
    %89 = vmatprep.subr.mxu0 0.0
    %90 = vmatpush1.msra.mxu0 0.0
    %91 = vmatprep.subr.mxu0 0.0
    %92 = vmatpush1.msra.mxu0 0.0
    %93 = vmatprep.subr.mxu0 0.0
    %94 = vmatpush1.msra.mxu0 0.0
    %95 = vmatprep.subr.mxu0 0.0
    %96 = vmatpush1.msra.mxu0 0.0
    %97 = vmatprep.subr.mxu0 0.0
    %98 = vmatpush1.msra.mxu0 0.0
    %99 = vmatprep.subr.mxu0 0.0
    %100 = vmatpush1.msra.mxu0 0.0
    %101 = vmatprep.subr.mxu0 0.0
    %102 = vmatpush1.msra.mxu0 0.0
    %103 = vmatprep.subr.mxu0 0.0
    %104 = vmatpush1.msra.mxu0 0.0
    %105 = vmatprep.subr.mxu0 0.0
    %106 = vmatpush1.msra.mxu0 0.0
    %107 = vmatprep.subr.mxu0 0.0
    %108 = vmatpush1.msra.mxu0 0.0
    %109 = vmatprep.subr.mxu0 0.0
    %110 = vmatpush1.msra.mxu0 0.0
    %111 = vmatprep.subr.mxu0 0.0
    %112 = vmatpush1.msra.mxu0 0.0
    %113 = vmatprep.subr.mxu0 0.0
    %114 = vmatpush1.msra.mxu0 0.0
    %115 = vmatprep.subr.mxu0 0.0
    %116 = vmatpush1.msra.mxu0 0.0
    %117 = vmatprep.subr.mxu0 0.0
    %118 = vmatpush1.msra.mxu0 0.0
    %119 = vmatprep.subr.mxu0 0.0
    %120 = vmatpush1.msra.mxu0 0.0
    %121 = vmatprep.subr.mxu0 0.0
    %122 = vmatpush1.msra.mxu0 0.0
    %123 = vmatprep.subr.mxu0 0.0
    %124 = vmatpush1.msra.mxu0 0.0
    %125 = vmatprep.subr.mxu0 0.0
    %126 = vmatpush1.msra.mxu0 0.0
    %127 = vmatprep.subr.mxu0 0.0
    %128 = vmatpush1.msra.mxu0 0.0
    %129 = vmatprep.subr.mxu0 0.0
    %130 = vmatpush1.msra.mxu0 0.0
    %131 = vmatprep.subr.mxu0 0.0
    %132 = vmatpush1.msra.mxu0 0.0
    %133 = vmatprep.subr.mxu0 0.0
    %134 = vmatpush1.msra.mxu0 0.0
    %135 = vmatprep.mubr.f32.mxu0 0.0
    %v136 = vand.u32 %v62, 4294901760
    %v137 = vsub.f32 %v62, %v136
    %v138 = vand.u32 %v137, 4294901760
    %v139 = vsub.f32 %v137, %v138
    %v140 = vand.u32 %v139, 4294901760
    %141 = vmatmul.mubr.f32.gmra.mrb[0].mxu0 %v140
    %v142 = vpop.f32.mrb[0].mxu0
    %v143 = vadd.f32 %v58, %v142
    %v144 = vpop.f32.mrb[0].mxu0
    %145 = vmatprep.mubr.f32.mxu0 0.0
    %v146 = vand.u32 %v65, 4294901760
    %v147 = vsub.f32 %v65, %v146
    %v148 = vand.u32 %v147, 4294901760
    %v149 = vsub.f32 %v147, %v148
    %v150 = vand.u32 %v149, 4294901760
    %151 = vmatmul.mubr.f32.gmra.mrb[0].mxu0 %v150
    %v152 = vpop.f32.mrb[0].mxu0
    %v153 = vadd.f32 %v58, %v152
    %v154 = vpop.f32.mrb[0].mxu0
    %155 = vdwg.mxu0
    %156 = vmatprep.subr.mxu0 0.0
    %v157 = vand.u32 %v49, 4294901760
    %v158 = vsub.f32 %v49, %v157
    %v159 = vand.u32 %v158, 4294901760
    %v160 = vsub.f32 %v158, %v159
    %v161 = vand.u32 %v160, 4294901760
    %162 = vmatpush1.msra.mxu0 %v161
    %163 = vmatprep.subr.mxu0 0.0
    %v164 = vand.u32 %v50, 4294901760
    %v165 = vsub.f32 %v50, %v164
    %v166 = vand.u32 %v165, 4294901760
    %v167 = vsub.f32 %v165, %v166
    %v168 = vand.u32 %v167, 4294901760
    %169 = vmatpush1.msra.mxu0 %v168
    %170 = vmatprep.subr.mxu0 0.0
    %v171 = vand.u32 %v51, 4294901760
    %v172 = vsub.f32 %v51, %v171
    %v173 = vand.u32 %v172, 4294901760
    %v174 = vsub.f32 %v172, %v173
    %v175 = vand.u32 %v174, 4294901760
    %176 = vmatpush1.msra.mxu0 %v175
    %177 = vmatprep.subr.mxu0 0.0
    %v178 = vand.u32 %v52, 4294901760
    %v179 = vsub.f32 %v52, %v178
    %v180 = vand.u32 %v179, 4294901760
    %v181 = vsub.f32 %v179, %v180
    %v182 = vand.u32 %v181, 4294901760
    %183 = vmatpush1.msra.mxu0 %v182
    %184 = vmatprep.subr.mxu0 0.0
    %185 = vmatpush1.msra.mxu0 0.0
    %186 = vmatprep.subr.mxu0 0.0
    %187 = vmatpush1.msra.mxu0 0.0
    %188 = vmatprep.subr.mxu0 0.0
    %189 = vmatpush1.msra.mxu0 0.0
    %190 = vmatprep.subr.mxu0 0.0
    %191 = vmatpush1.msra.mxu0 0.0
    %192 = vmatprep.subr.mxu0 0.0
    %193 = vmatpush1.msra.mxu0 0.0
    %194 = vmatprep.subr.mxu0 0.0
    %195 = vmatpush1.msra.mxu0 0.0
    %196 = vmatprep.subr.mxu0 0.0
    %197 = vmatpush1.msra.mxu0 0.0
    %198 = vmatprep.subr.mxu0 0.0
    %199 = vmatpush1.msra.mxu0 0.0
    %200 = vmatprep.subr.mxu0 0.0
    %201 = vmatpush1.msra.mxu0 0.0
    %202 = vmatprep.subr.mxu0 0.0
    %203 = vmatpush1.msra.mxu0 0.0
    %204 = vmatprep.subr.mxu0 0.0
    %205 = vmatpush1.msra.mxu0 0.0
    %206 = vmatprep.subr.mxu0 0.0
    %207 = vmatpush1.msra.mxu0 0.0
    %208 = vmatprep.subr.mxu0 0.0
    %209 = vmatpush1.msra.mxu0 0.0
    %210 = vmatprep.subr.mxu0 0.0
    %211 = vmatpush1.msra.mxu0 0.0
    %212 = vmatprep.subr.mxu0 0.0
    %213 = vmatpush1.msra.mxu0 0.0
    %214 = vmatprep.subr.mxu0 0.0
    %215 = vmatpush1.msra.mxu0 0.0
    %216 = vmatprep.subr.mxu0 0.0
    %217 = vmatpush1.msra.mxu0 0.0
    %218 = vmatprep.subr.mxu0 0.0
    %219 = vmatpush1.msra.mxu0 0.0
    %220 = vmatprep.subr.mxu0 0.0
    %221 = vmatpush1.msra.mxu0 0.0
    %222 = vmatprep.subr.mxu0 0.0
    %223 = vmatpush1.msra.mxu0 0.0
    %224 = vmatprep.subr.mxu0 0.0
    %225 = vmatpush1.msra.mxu0 0.0
    %226 = vmatprep.subr.mxu0 0.0
    %227 = vmatpush1.msra.mxu0 0.0
    %228 = vmatprep.subr.mxu0 0.0
    %229 = vmatpush1.msra.mxu0 0.0
    %230 = vmatprep.subr.mxu0 0.0
    %231 = vmatpush1.msra.mxu0 0.0
    %232 = vmatprep.subr.mxu0 0.0
    %233 = vmatpush1.msra.mxu0 0.0
    %234 = vmatprep.subr.mxu0 0.0
    %235 = vmatpush1.msra.mxu0 0.0
    %236 = vmatprep.subr.mxu0 0.0
    %237 = vmatpush1.msra.mxu0 0.0
    %238 = vmatprep.subr.mxu0 0.0
    %239 = vmatpush1.msra.mxu0 0.0
    %240 = vmatprep.mubr.f32.mxu0 0.0
    %v241 = vand.u32 %v62, 4294901760
    %242 = vmatmul.mubr.f32.gmra.mrb[0].mxu0 %v241
    %v243 = vpop.f32.mrb[0].mxu0
    %v244 = vadd.f32 %v143, %v243
    %v245 = vpop.f32.mrb[0].mxu0
    %246 = vmatprep.mubr.f32.mxu0 0.0
    %v247 = vand.u32 %v65, 4294901760
    %248 = vmatmul.mubr.f32.gmra.mrb[0].mxu0 %v247
    %v249 = vpop.f32.mrb[0].mxu0
    %v250 = vadd.f32 %v153, %v249
    %v251 = vpop.f32.mrb[0].mxu0
    %252 = vdwg.mxu0
    %253 = vmatprep.subr.mxu0 0.0
    %v254 = vand.u32 %v49, 4294901760
    %v255 = vsub.f32 %v49, %v254
    %256 = vmatpush1.msra.mxu0 %v255
    %257 = vmatprep.subr.mxu0 0.0
    %v258 = vand.u32 %v50, 4294901760
    %v259 = vsub.f32 %v50, %v258
    %260 = vmatpush1.msra.mxu0 %v259
    %261 = vmatprep.subr.mxu0 0.0
    %v262 = vand.u32 %v51, 4294901760
    %v263 = vsub.f32 %v51, %v262
    %264 = vmatpush1.msra.mxu0 %v263
    %265 = vmatprep.subr.mxu0 0.0
    %v266 = vand.u32 %v52, 4294901760
    %v267 = vsub.f32 %v52, %v266
    %268 = vmatpush1.msra.mxu0 %v267
    %269 = vmatprep.subr.mxu0 0.0
    %270 = vmatpush1.msra.mxu0 0.0
    %271 = vmatprep.subr.mxu0 0.0
    %272 = vmatpush1.msra.mxu0 0.0
    %273 = vmatprep.subr.mxu0 0.0
    %274 = vmatpush1.msra.mxu0 0.0
    %275 = vmatprep.subr.mxu0 0.0
    %276 = vmatpush1.msra.mxu0 0.0
    %277 = vmatprep.subr.mxu0 0.0
    %278 = vmatpush1.msra.mxu0 0.0
    %279 = vmatprep.subr.mxu0 0.0
    %280 = vmatpush1.msra.mxu0 0.0
    %281 = vmatprep.subr.mxu0 0.0
    %282 = vmatpush1.msra.mxu0 0.0
    %283 = vmatprep.subr.mxu0 0.0
    %284 = vmatpush1.msra.mxu0 0.0
    %285 = vmatprep.subr.mxu0 0.0
    %286 = vmatpush1.msra.mxu0 0.0
    %287 = vmatprep.subr.mxu0 0.0
    %288 = vmatpush1.msra.mxu0 0.0
    %289 = vmatprep.subr.mxu0 0.0
    %290 = vmatpush1.msra.mxu0 0.0
    %291 = vmatprep.subr.mxu0 0.0
    %292 = vmatpush1.msra.mxu0 0.0
    %293 = vmatprep.subr.mxu0 0.0
    %294 = vmatpush1.msra.mxu0 0.0
    %295 = vmatprep.subr.mxu0 0.0
    %296 = vmatpush1.msra.mxu0 0.0
    %297 = vmatprep.subr.mxu0 0.0
    %298 = vmatpush1.msra.mxu0 0.0
    %299 = vmatprep.subr.mxu0 0.0
    %300 = vmatpush1.msra.mxu0 0.0
    %301 = vmatprep.subr.mxu0 0.0
    %302 = vmatpush1.msra.mxu0 0.0
    %303 = vmatprep.subr.mxu0 0.0
    %304 = vmatpush1.msra.mxu0 0.0
    %305 = vmatprep.subr.mxu0 0.0
    %306 = vmatpush1.msra.mxu0 0.0
    %307 = vmatprep.subr.mxu0 0.0
    %308 = vmatpush1.msra.mxu0 0.0
    %309 = vmatprep.subr.mxu0 0.0
    %310 = vmatpush1.msra.mxu0 0.0
    %311 = vmatprep.subr.mxu0 0.0
    %312 = vmatpush1.msra.mxu0 0.0
    %313 = vmatprep.subr.mxu0 0.0
    %314 = vmatpush1.msra.mxu0 0.0
    %315 = vmatprep.subr.mxu0 0.0
    %316 = vmatpush1.msra.mxu0 0.0
    %317 = vmatprep.subr.mxu0 0.0
    %318 = vmatpush1.msra.mxu0 0.0
    %319 = vmatprep.subr.mxu0 0.0
    %320 = vmatpush1.msra.mxu0 0.0
    %321 = vmatprep.subr.mxu0 0.0
    %322 = vmatpush1.msra.mxu0 0.0
    %323 = vmatprep.subr.mxu0 0.0
    %324 = vmatpush1.msra.mxu0 0.0
    %325 = vmatprep.mubr.f32.mxu0 0.0
    %v326 = vand.u32 %v62, 4294901760
    %v327 = vsub.f32 %v62, %v326
    %328 = vmatmul.mubr.f32.gmra.mrb[0].mxu0 %v327
    %v329 = vpop.f32.mrb[0].mxu0
    %v330 = vadd.f32 %v244, %v329
    %v331 = vpop.f32.mrb[0].mxu0
    %332 = vmatprep.mubr.f32.mxu0 0.0
    %v333 = vand.u32 %v65, 4294901760
    %v334 = vsub.f32 %v65, %v333
    %335 = vmatmul.mubr.f32.gmra.mrb[0].mxu0 %v334
    %v336 = vpop.f32.mrb[0].mxu0
    %v337 = vadd.f32 %v250, %v336
    %v338 = vpop.f32.mrb[0].mxu0
    %339 = vdwg.mxu0
    %340 = vmatprep.subr.mxu0 0.0
    %v341 = vand.u32 %v49, 4294901760
    %342 = vmatpush1.msra.mxu0 %v341
    %343 = vmatprep.subr.mxu0 0.0
    %v344 = vand.u32 %v50, 4294901760
    %345 = vmatpush1.msra.mxu0 %v344
    %346 = vmatprep.subr.mxu0 0.0
    %v347 = vand.u32 %v51, 4294901760
    %348 = vmatpush1.msra.mxu0 %v347
    %349 = vmatprep.subr.mxu0 0.0
    %v350 = vand.u32 %v52, 4294901760
    %351 = vmatpush1.msra.mxu0 %v350
    %352 = vmatprep.subr.mxu0 0.0
    %353 = vmatpush1.msra.mxu0 0.0
    %354 = vmatprep.subr.mxu0 0.0
    %355 = vmatpush1.msra.mxu0 0.0
    %356 = vmatprep.subr.mxu0 0.0
    %357 = vmatpush1.msra.mxu0 0.0
    %358 = vmatprep.subr.mxu0 0.0
    %359 = vmatpush1.msra.mxu0 0.0
    %360 = vmatprep.subr.mxu0 0.0
    %361 = vmatpush1.msra.mxu0 0.0
    %362 = vmatprep.subr.mxu0 0.0
    %363 = vmatpush1.msra.mxu0 0.0
    %364 = vmatprep.subr.mxu0 0.0
    %365 = vmatpush1.msra.mxu0 0.0
    %366 = vmatprep.subr.mxu0 0.0
    %367 = vmatpush1.msra.mxu0 0.0
    %368 = vmatprep.subr.mxu0 0.0
    %369 = vmatpush1.msra.mxu0 0.0
    %370 = vmatprep.subr.mxu0 0.0
    %371 = vmatpush1.msra.mxu0 0.0
    %372 = vmatprep.subr.mxu0 0.0
    %373 = vmatpush1.msra.mxu0 0.0
    %374 = vmatprep.subr.mxu0 0.0
    %375 = vmatpush1.msra.mxu0 0.0
    %376 = vmatprep.subr.mxu0 0.0
    %377 = vmatpush1.msra.mxu0 0.0
    %378 = vmatprep.subr.mxu0 0.0
    %379 = vmatpush1.msra.mxu0 0.0
    %380 = vmatprep.subr.mxu0 0.0
    %381 = vmatpush1.msra.mxu0 0.0
    %382 = vmatprep.subr.mxu0 0.0
    %383 = vmatpush1.msra.mxu0 0.0
    %384 = vmatprep.subr.mxu0 0.0
    %385 = vmatpush1.msra.mxu0 0.0
    %386 = vmatprep.subr.mxu0 0.0
    %387 = vmatpush1.msra.mxu0 0.0
    %388 = vmatprep.subr.mxu0 0.0
    %389 = vmatpush1.msra.mxu0 0.0
    %390 = vmatprep.subr.mxu0 0.0
    %391 = vmatpush1.msra.mxu0 0.0
    %392 = vmatprep.subr.mxu0 0.0
    %393 = vmatpush1.msra.mxu0 0.0
    %394 = vmatprep.subr.mxu0 0.0
    %395 = vmatpush1.msra.mxu0 0.0
    %396 = vmatprep.subr.mxu0 0.0
    %397 = vmatpush1.msra.mxu0 0.0
    %398 = vmatprep.subr.mxu0 0.0
    %399 = vmatpush1.msra.mxu0 0.0
    %400 = vmatprep.subr.mxu0 0.0
    %401 = vmatpush1.msra.mxu0 0.0
    %402 = vmatprep.subr.mxu0 0.0
    %403 = vmatpush1.msra.mxu0 0.0
    %404 = vmatprep.subr.mxu0 0.0
    %405 = vmatpush1.msra.mxu0 0.0
    %406 = vmatprep.subr.mxu0 0.0
    %407 = vmatpush1.msra.mxu0 0.0
    %408 = vmatprep.mubr.f32.mxu0 0.0
    %v409 = vand.u32 %v62, 4294901760
    %v410 = vsub.f32 %v62, %v409
    %v411 = vand.u32 %v410, 4294901760
    %412 = vmatmul.mubr.f32.gmra.mrb[0].mxu0 %v411
    %v413 = vpop.f32.mrb[0].mxu0
    %v414 = vadd.f32 %v330, %v413
    %v415 = vpop.f32.mrb[0].mxu0
    %416 = vmatprep.mubr.f32.mxu0 0.0
    %v417 = vand.u32 %v65, 4294901760
    %v418 = vsub.f32 %v65, %v417
    %v419 = vand.u32 %v418, 4294901760
    %420 = vmatmul.mubr.f32.gmra.mrb[0].mxu0 %v419
    %v421 = vpop.f32.mrb[0].mxu0
    %v422 = vadd.f32 %v337, %v421
    %v423 = vpop.f32.mrb[0].mxu0
    %424 = vdwg.mxu0
    %425 = vmatprep.subr.mxu0 0.0
    %v426 = vand.u32 %v49, 4294901760
    %v427 = vsub.f32 %v49, %v426
    %v428 = vand.u32 %v427, 4294901760
    %429 = vmatpush1.msra.mxu0 %v428
    %430 = vmatprep.subr.mxu0 0.0
    %v431 = vand.u32 %v50, 4294901760
    %v432 = vsub.f32 %v50, %v431
    %v433 = vand.u32 %v432, 4294901760
    %434 = vmatpush1.msra.mxu0 %v433
    %435 = vmatprep.subr.mxu0 0.0
    %v436 = vand.u32 %v51, 4294901760
    %v437 = vsub.f32 %v51, %v436
    %v438 = vand.u32 %v437, 4294901760
    %439 = vmatpush1.msra.mxu0 %v438
    %440 = vmatprep.subr.mxu0 0.0
    %v441 = vand.u32 %v52, 4294901760
    %v442 = vsub.f32 %v52, %v441
    %v443 = vand.u32 %v442, 4294901760
    %444 = vmatpush1.msra.mxu0 %v443
    %445 = vmatprep.subr.mxu0 0.0
    %446 = vmatpush1.msra.mxu0 0.0
    %447 = vmatprep.subr.mxu0 0.0
    %448 = vmatpush1.msra.mxu0 0.0
    %449 = vmatprep.subr.mxu0 0.0
    %450 = vmatpush1.msra.mxu0 0.0
    %451 = vmatprep.subr.mxu0 0.0
    %452 = vmatpush1.msra.mxu0 0.0
    %453 = vmatprep.subr.mxu0 0.0
    %454 = vmatpush1.msra.mxu0 0.0
    %455 = vmatprep.subr.mxu0 0.0
    %456 = vmatpush1.msra.mxu0 0.0
    %457 = vmatprep.subr.mxu0 0.0
    %458 = vmatpush1.msra.mxu0 0.0
    %459 = vmatprep.subr.mxu0 0.0
    %460 = vmatpush1.msra.mxu0 0.0
    %461 = vmatprep.subr.mxu0 0.0
    %462 = vmatpush1.msra.mxu0 0.0
    %463 = vmatprep.subr.mxu0 0.0
    %464 = vmatpush1.msra.mxu0 0.0
    %465 = vmatprep.subr.mxu0 0.0
    %466 = vmatpush1.msra.mxu0 0.0
    %467 = vmatprep.subr.mxu0 0.0
    %468 = vmatpush1.msra.mxu0 0.0
    %469 = vmatprep.subr.mxu0 0.0
    %470 = vmatpush1.msra.mxu0 0.0
    %471 = vmatprep.subr.mxu0 0.0
    %472 = vmatpush1.msra.mxu0 0.0
    %473 = vmatprep.subr.mxu0 0.0
    %474 = vmatpush1.msra.mxu0 0.0
    %475 = vmatprep.subr.mxu0 0.0
    %476 = vmatpush1.msra.mxu0 0.0
    %477 = vmatprep.subr.mxu0 0.0
    %478 = vmatpush1.msra.mxu0 0.0
    %479 = vmatprep.subr.mxu0 0.0
    %480 = vmatpush1.msra.mxu0 0.0
    %481 = vmatprep.subr.mxu0 0.0
    %482 = vmatpush1.msra.mxu0 0.0
    %483 = vmatprep.subr.mxu0 0.0
    %484 = vmatpush1.msra.mxu0 0.0
    %485 = vmatprep.subr.mxu0 0.0
    %486 = vmatpush1.msra.mxu0 0.0
    %487 = vmatprep.subr.mxu0 0.0
    %488 = vmatpush1.msra.mxu0 0.0
    %489 = vmatprep.subr.mxu0 0.0
    %490 = vmatpush1.msra.mxu0 0.0
    %491 = vmatprep.subr.mxu0 0.0
    %492 = vmatpush1.msra.mxu0 0.0
    %493 = vmatprep.subr.mxu0 0.0
    %494 = vmatpush1.msra.mxu0 0.0
    %495 = vmatprep.subr.mxu0 0.0
    %496 = vmatpush1.msra.mxu0 0.0
    %497 = vmatprep.subr.mxu0 0.0
    %498 = vmatpush1.msra.mxu0 0.0
    %499 = vmatprep.subr.mxu0 0.0
    %500 = vmatpush1.msra.mxu0 0.0
    %501 = vmatprep.mubr.f32.mxu0 0.0
    %v502 = vand.u32 %v62, 4294901760
    %503 = vmatmul.mubr.f32.gmra.mrb[0].mxu0 %v502
    %v504 = vpop.f32.mrb[0].mxu0
    %v505 = vadd.f32 %v414, %v504
    %v506 = vpop.f32.mrb[0].mxu0
    %507 = vmatprep.mubr.f32.mxu0 0.0
    %v508 = vand.u32 %v65, 4294901760
    %509 = vmatmul.mubr.f32.gmra.mrb[0].mxu0 %v508
    %v510 = vpop.f32.mrb[0].mxu0
    %v511 = vadd.f32 %v422, %v510
    %v512 = vpop.f32.mrb[0].mxu0
    %513 = vdwg.mxu0
    %514 = vmatprep.subr.mxu0 0.0
    %v515 = vand.u32 %v49, 4294901760
    %516 = vmatpush1.msra.mxu0 %v515
    %517 = vmatprep.subr.mxu0 0.0
    %v518 = vand.u32 %v50, 4294901760
    %519 = vmatpush1.msra.mxu0 %v518
    %520 = vmatprep.subr.mxu0 0.0
    %v521 = vand.u32 %v51, 4294901760
    %522 = vmatpush1.msra.mxu0 %v521
    %523 = vmatprep.subr.mxu0 0.0
    %v524 = vand.u32 %v52, 4294901760
    %525 = vmatpush1.msra.mxu0 %v524
    %526 = vmatprep.subr.mxu0 0.0
    %527 = vmatpush1.msra.mxu0 0.0
    %528 = vmatprep.subr.mxu0 0.0
    %529 = vmatpush1.msra.mxu0 0.0
    %530 = vmatprep.subr.mxu0 0.0
    %531 = vmatpush1.msra.mxu0 0.0
    %532 = vmatprep.subr.mxu0 0.0
    %533 = vmatpush1.msra.mxu0 0.0
    %534 = vmatprep.subr.mxu0 0.0
    %535 = vmatpush1.msra.mxu0 0.0
    %536 = vmatprep.subr.mxu0 0.0
    %537 = vmatpush1.msra.mxu0 0.0
    %538 = vmatprep.subr.mxu0 0.0
    %539 = vmatpush1.msra.mxu0 0.0
    %540 = vmatprep.subr.mxu0 0.0
    %541 = vmatpush1.msra.mxu0 0.0
    %542 = vmatprep.subr.mxu0 0.0
    %543 = vmatpush1.msra.mxu0 0.0
    %544 = vmatprep.subr.mxu0 0.0
    %545 = vmatpush1.msra.mxu0 0.0
    %546 = vmatprep.subr.mxu0 0.0
    %547 = vmatpush1.msra.mxu0 0.0
    %548 = vmatprep.subr.mxu0 0.0
    %549 = vmatpush1.msra.mxu0 0.0
    %550 = vmatprep.subr.mxu0 0.0
    %551 = vmatpush1.msra.mxu0 0.0
    %552 = vmatprep.subr.mxu0 0.0
    %553 = vmatpush1.msra.mxu0 0.0
    %554 = vmatprep.subr.mxu0 0.0
    %555 = vmatpush1.msra.mxu0 0.0
    %556 = vmatprep.subr.mxu0 0.0
    %557 = vmatpush1.msra.mxu0 0.0
    %558 = vmatprep.subr.mxu0 0.0
    %559 = vmatpush1.msra.mxu0 0.0
    %560 = vmatprep.subr.mxu0 0.0
    %561 = vmatpush1.msra.mxu0 0.0
    %562 = vmatprep.subr.mxu0 0.0
    %563 = vmatpush1.msra.mxu0 0.0
    %564 = vmatprep.subr.mxu0 0.0
    %565 = vmatpush1.msra.mxu0 0.0
    %566 = vmatprep.subr.mxu0 0.0
    %567 = vmatpush1.msra.mxu0 0.0
    %568 = vmatprep.subr.mxu0 0.0
    %569 = vmatpush1.msra.mxu0 0.0
    %570 = vmatprep.subr.mxu0 0.0
    %571 = vmatpush1.msra.mxu0 0.0
    %572 = vmatprep.subr.mxu0 0.0
    %573 = vmatpush1.msra.mxu0 0.0
    %574 = vmatprep.subr.mxu0 0.0
    %575 = vmatpush1.msra.mxu0 0.0
    %576 = vmatprep.subr.mxu0 0.0
    %577 = vmatpush1.msra.mxu0 0.0
    %578 = vmatprep.subr.mxu0 0.0
    %579 = vmatpush1.msra.mxu0 0.0
    %580 = vmatprep.subr.mxu0 0.0
    %581 = vmatpush1.msra.mxu0 0.0
    %582 = vmatprep.mubr.f32.mxu0 0.0
    %v583 = vand.u32 %v62, 4294901760
    %584 = vmatmul.mubr.f32.gmra.mrb[0].mxu0 %v583
    %v585 = vpop.f32.mrb[0].mxu0
    %v586 = vadd.f32 %v505, %v585
    %v587 = vpop.f32.mrb[0].mxu0
    %588 = vmatprep.mubr.f32.mxu0 0.0
    %v589 = vand.u32 %v65, 4294901760
    %590 = vmatmul.mubr.f32.gmra.mrb[0].mxu0 %v589
    %v591 = vpop.f32.mrb[0].mxu0
    %v592 = vadd.f32 %v511, %v591
    %v593 = vpop.f32.mrb[0].mxu0
    %594 = vdwg.mxu0
    %596 = vrot.lane.b32.xlu0 %v586, 96
    %v597 = vpop.permute.xlu0 %596
    %v598 = vsel %vm60, %v586, 0
    %v600 = vsel %vm60, %v597, 0
    %602 = vmatprep.subr.mxu0 0.0
    %v603 = vand.u32 %v600, 4294901760
    %604 = vmatpush1.xpose.msra.mxu0 %v603
    %605 = vmatprep.subr.mxu0 0.0
    %606 = vmatpush1.xpose.msra.mxu0 0.0
    %607 = vmatprep.subr.mxu0 0.0
    %608 = vmatpush1.xpose.msra.mxu0 0.0
    %609 = vmatprep.subr.mxu0 0.0
    %610 = vmatpush1.xpose.msra.mxu0 0.0
    %611 = vmatprep.subr.mxu0 0.0
    %612 = vmatpush1.xpose.msra.mxu0 0.0
    %613 = vmatprep.subr.mxu0 0.0
    %614 = vmatpush1.xpose.msra.mxu0 0.0
    %615 = vmatprep.subr.mxu0 0.0
    %616 = vmatpush1.xpose.msra.mxu0 0.0
    %617 = vmatprep.subr.mxu0 0.0
    %618 = vmatpush1.xpose.msra.mxu0 0.0
    %619 = vmatprep.subr.mxu0 0.0
    %620 = vmatpush1.xpose.msra.mxu0 0.0
    %621 = vmatprep.subr.mxu0 0.0
    %622 = vmatpush1.xpose.msra.mxu0 0.0
    %623 = vmatprep.subr.mxu0 0.0
    %624 = vmatpush1.xpose.msra.mxu0 0.0
    %625 = vmatprep.subr.mxu0 0.0
    %626 = vmatpush1.xpose.msra.mxu0 0.0
    %627 = vmatprep.subr.mxu0 0.0
    %628 = vmatpush1.xpose.msra.mxu0 0.0
    %629 = vmatprep.subr.mxu0 0.0
    %630 = vmatpush1.xpose.msra.mxu0 0.0
    %631 = vmatprep.subr.mxu0 0.0
    %632 = vmatpush1.xpose.msra.mxu0 0.0
    %633 = vmatprep.subr.mxu0 0.0
    %634 = vmatpush1.xpose.msra.mxu0 0.0
    %635 = vmatprep.subr.mxu0 0.0
    %636 = vmatpush1.xpose.msra.mxu0 0.0
    %637 = vmatprep.subr.mxu0 0.0
    %638 = vmatpush1.xpose.msra.mxu0 0.0
    %639 = vmatprep.subr.mxu0 0.0
    %640 = vmatpush1.xpose.msra.mxu0 0.0
    %641 = vmatprep.subr.mxu0 0.0
    %642 = vmatpush1.xpose.msra.mxu0 0.0
    %643 = vmatprep.subr.mxu0 0.0
    %644 = vmatpush1.xpose.msra.mxu0 0.0
    %645 = vmatprep.subr.mxu0 0.0
    %646 = vmatpush1.xpose.msra.mxu0 0.0
    %647 = vmatprep.subr.mxu0 0.0
    %648 = vmatpush1.xpose.msra.mxu0 0.0
    %649 = vmatprep.subr.mxu0 0.0
    %650 = vmatpush1.xpose.msra.mxu0 0.0
    %651 = vmatprep.subr.mxu0 0.0
    %652 = vmatpush1.xpose.msra.mxu0 0.0
    %653 = vmatprep.subr.mxu0 0.0
    %654 = vmatpush1.xpose.msra.mxu0 0.0
    %655 = vmatprep.subr.mxu0 0.0
    %656 = vmatpush1.xpose.msra.mxu0 0.0
    %657 = vmatprep.subr.mxu0 0.0
    %658 = vmatpush1.xpose.msra.mxu0 0.0
    %659 = vmatprep.subr.mxu0 0.0
    %660 = vmatpush1.xpose.msra.mxu0 0.0
    %661 = vmatprep.subr.mxu0 0.0
    %662 = vmatpush1.xpose.msra.mxu0 0.0
    %663 = vmatprep.subr.mxu0 0.0
    %664 = vmatpush1.xpose.msra.mxu0 0.0
    %665 = vmatprep.subr.mxu0 0.0
    %666 = vmatpush1.xpose.msra.mxu0 0.0
    %667 = vmatprep.mubr.f32.mxu0 0.0
    %v668 = vand.u32 %v598, 4294901760
    %v669 = vsub.f32 %v598, %v668
    %v670 = vand.u32 %v669, 4294901760
    %v671 = vsub.f32 %v669, %v670
    %v672 = vand.u32 %v671, 4294901760
    %673 = vmatmul.mubr.f32.gmra.mrb[0].mxu0 %v672
    %v674 = vpop.f32.mrb[0].mxu0
    %v675 = vadd.f32 0.0, %v674
    %v676 = vpop.f32.mrb[0].mxu0
    %677 = vdwg.mxu0
    %678 = vmatprep.subr.mxu0 0.0
    %v679 = vand.u32 %v600, 4294901760
    %v680 = vsub.f32 %v600, %v679
    %v681 = vand.u32 %v680, 4294901760
    %v682 = vsub.f32 %v680, %v681
    %v683 = vand.u32 %v682, 4294901760
    %684 = vmatpush1.xpose.msra.mxu0 %v683
    %685 = vmatprep.subr.mxu0 0.0
    %686 = vmatpush1.xpose.msra.mxu0 0.0
    %687 = vmatprep.subr.mxu0 0.0
    %688 = vmatpush1.xpose.msra.mxu0 0.0
    %689 = vmatprep.subr.mxu0 0.0
    %690 = vmatpush1.xpose.msra.mxu0 0.0
    %691 = vmatprep.subr.mxu0 0.0
    %692 = vmatpush1.xpose.msra.mxu0 0.0
    %693 = vmatprep.subr.mxu0 0.0
    %694 = vmatpush1.xpose.msra.mxu0 0.0
    %695 = vmatprep.subr.mxu0 0.0
    %696 = vmatpush1.xpose.msra.mxu0 0.0
    %697 = vmatprep.subr.mxu0 0.0
    %698 = vmatpush1.xpose.msra.mxu0 0.0
    %699 = vmatprep.subr.mxu0 0.0
    %700 = vmatpush1.xpose.msra.mxu0 0.0
    %701 = vmatprep.subr.mxu0 0.0
    %702 = vmatpush1.xpose.msra.mxu0 0.0
    %703 = vmatprep.subr.mxu0 0.0
    %704 = vmatpush1.xpose.msra.mxu0 0.0
    %705 = vmatprep.subr.mxu0 0.0
    %706 = vmatpush1.xpose.msra.mxu0 0.0
    %707 = vmatprep.subr.mxu0 0.0
    %708 = vmatpush1.xpose.msra.mxu0 0.0
    %709 = vmatprep.subr.mxu0 0.0
    %710 = vmatpush1.xpose.msra.mxu0 0.0
    %711 = vmatprep.subr.mxu0 0.0
    %712 = vmatpush1.xpose.msra.mxu0 0.0
    %713 = vmatprep.subr.mxu0 0.0
    %714 = vmatpush1.xpose.msra.mxu0 0.0
    %715 = vmatprep.subr.mxu0 0.0
    %716 = vmatpush1.xpose.msra.mxu0 0.0
    %717 = vmatprep.subr.mxu0 0.0
    %718 = vmatpush1.xpose.msra.mxu0 0.0
    %719 = vmatprep.subr.mxu0 0.0
    %720 = vmatpush1.xpose.msra.mxu0 0.0
    %721 = vmatprep.subr.mxu0 0.0
    %722 = vmatpush1.xpose.msra.mxu0 0.0
    %723 = vmatprep.subr.mxu0 0.0
    %724 = vmatpush1.xpose.msra.mxu0 0.0
    %725 = vmatprep.subr.mxu0 0.0
    %726 = vmatpush1.xpose.msra.mxu0 0.0
    %727 = vmatprep.subr.mxu0 0.0
    %728 = vmatpush1.xpose.msra.mxu0 0.0
    %729 = vmatprep.subr.mxu0 0.0
    %730 = vmatpush1.xpose.msra.mxu0 0.0
    %731 = vmatprep.subr.mxu0 0.0
    %732 = vmatpush1.xpose.msra.mxu0 0.0
    %733 = vmatprep.subr.mxu0 0.0
    %734 = vmatpush1.xpose.msra.mxu0 0.0
    %735 = vmatprep.subr.mxu0 0.0
    %736 = vmatpush1.xpose.msra.mxu0 0.0
    %737 = vmatprep.subr.mxu0 0.0
    %738 = vmatpush1.xpose.msra.mxu0 0.0
    %739 = vmatprep.subr.mxu0 0.0
    %740 = vmatpush1.xpose.msra.mxu0 0.0
    %741 = vmatprep.subr.mxu0 0.0
    %742 = vmatpush1.xpose.msra.mxu0 0.0
    %743 = vmatprep.subr.mxu0 0.0
    %744 = vmatpush1.xpose.msra.mxu0 0.0
    %745 = vmatprep.subr.mxu0 0.0
    %746 = vmatpush1.xpose.msra.mxu0 0.0
    %747 = vmatprep.mubr.f32.mxu0 0.0
    %v748 = vand.u32 %v598, 4294901760
    %749 = vmatmul.mubr.f32.gmra.mrb[0].mxu0 %v748
    %v750 = vpop.f32.mrb[0].mxu0
    %v751 = vadd.f32 %v675, %v750
    %v752 = vpop.f32.mrb[0].mxu0
    %753 = vdwg.mxu0
    %754 = vmatprep.subr.mxu0 0.0
    %v755 = vand.u32 %v600, 4294901760
    %v756 = vsub.f32 %v600, %v755
    %757 = vmatpush1.xpose.msra.mxu0 %v756
    %758 = vmatprep.subr.mxu0 0.0
    %759 = vmatpush1.xpose.msra.mxu0 0.0
    %760 = vmatprep.subr.mxu0 0.0
    %761 = vmatpush1.xpose.msra.mxu0 0.0
    %762 = vmatprep.subr.mxu0 0.0
    %763 = vmatpush1.xpose.msra.mxu0 0.0
    %764 = vmatprep.subr.mxu0 0.0
    %765 = vmatpush1.xpose.msra.mxu0 0.0
    %766 = vmatprep.subr.mxu0 0.0
    %767 = vmatpush1.xpose.msra.mxu0 0.0
    %768 = vmatprep.subr.mxu0 0.0
    %769 = vmatpush1.xpose.msra.mxu0 0.0
    %770 = vmatprep.subr.mxu0 0.0
    %771 = vmatpush1.xpose.msra.mxu0 0.0
    %772 = vmatprep.subr.mxu0 0.0
    %773 = vmatpush1.xpose.msra.mxu0 0.0
    %774 = vmatprep.subr.mxu0 0.0
    %775 = vmatpush1.xpose.msra.mxu0 0.0
    %776 = vmatprep.subr.mxu0 0.0
    %777 = vmatpush1.xpose.msra.mxu0 0.0
    %778 = vmatprep.subr.mxu0 0.0
    %779 = vmatpush1.xpose.msra.mxu0 0.0
    %780 = vmatprep.subr.mxu0 0.0
    %781 = vmatpush1.xpose.msra.mxu0 0.0
    %782 = vmatprep.subr.mxu0 0.0
    %783 = vmatpush1.xpose.msra.mxu0 0.0
    %784 = vmatprep.subr.mxu0 0.0
    %785 = vmatpush1.xpose.msra.mxu0 0.0
    %786 = vmatprep.subr.mxu0 0.0
    %787 = vmatpush1.xpose.msra.mxu0 0.0
    %788 = vmatprep.subr.mxu0 0.0
    %789 = vmatpush1.xpose.msra.mxu0 0.0
    %790 = vmatprep.subr.mxu0 0.0
    %791 = vmatpush1.xpose.msra.mxu0 0.0
    %792 = vmatprep.subr.mxu0 0.0
    %793 = vmatpush1.xpose.msra.mxu0 0.0
    %794 = vmatprep.subr.mxu0 0.0
    %795 = vmatpush1.xpose.msra.mxu0 0.0
    %796 = vmatprep.subr.mxu0 0.0
    %797 = vmatpush1.xpose.msra.mxu0 0.0
    %798 = vmatprep.subr.mxu0 0.0
    %799 = vmatpush1.xpose.msra.mxu0 0.0
    %800 = vmatprep.subr.mxu0 0.0
    %801 = vmatpush1.xpose.msra.mxu0 0.0
    %802 = vmatprep.subr.mxu0 0.0
    %803 = vmatpush1.xpose.msra.mxu0 0.0
    %804 = vmatprep.subr.mxu0 0.0
    %805 = vmatpush1.xpose.msra.mxu0 0.0
    %806 = vmatprep.subr.mxu0 0.0
    %807 = vmatpush1.xpose.msra.mxu0 0.0
    %808 = vmatprep.subr.mxu0 0.0
    %809 = vmatpush1.xpose.msra.mxu0 0.0
    %810 = vmatprep.subr.mxu0 0.0
    %811 = vmatpush1.xpose.msra.mxu0 0.0
    %812 = vmatprep.subr.mxu0 0.0
    %813 = vmatpush1.xpose.msra.mxu0 0.0
    %814 = vmatprep.subr.mxu0 0.0
    %815 = vmatpush1.xpose.msra.mxu0 0.0
    %816 = vmatprep.subr.mxu0 0.0
    %817 = vmatpush1.xpose.msra.mxu0 0.0
    %818 = vmatprep.subr.mxu0 0.0
    %819 = vmatpush1.xpose.msra.mxu0 0.0
    %820 = vmatprep.mubr.f32.mxu0 0.0
    %v821 = vand.u32 %v598, 4294901760
    %v822 = vsub.f32 %v598, %v821
    %823 = vmatmul.mubr.f32.gmra.mrb[0].mxu0 %v822
    %v824 = vpop.f32.mrb[0].mxu0
    %v825 = vadd.f32 %v751, %v824
    %v826 = vpop.f32.mrb[0].mxu0
    %827 = vdwg.mxu0
    %828 = vmatprep.subr.mxu0 0.0
    %v829 = vand.u32 %v600, 4294901760
    %830 = vmatpush1.xpose.msra.mxu0 %v829
    %831 = vmatprep.subr.mxu0 0.0
    %832 = vmatpush1.xpose.msra.mxu0 0.0
    %833 = vmatprep.subr.mxu0 0.0
    %834 = vmatpush1.xpose.msra.mxu0 0.0
    %835 = vmatprep.subr.mxu0 0.0
    %836 = vmatpush1.xpose.msra.mxu0 0.0
    %837 = vmatprep.subr.mxu0 0.0
    %838 = vmatpush1.xpose.msra.mxu0 0.0
    %839 = vmatprep.subr.mxu0 0.0
    %840 = vmatpush1.xpose.msra.mxu0 0.0
    %841 = vmatprep.subr.mxu0 0.0
    %842 = vmatpush1.xpose.msra.mxu0 0.0
    %843 = vmatprep.subr.mxu0 0.0
    %844 = vmatpush1.xpose.msra.mxu0 0.0
    %845 = vmatprep.subr.mxu0 0.0
    %846 = vmatpush1.xpose.msra.mxu0 0.0
    %847 = vmatprep.subr.mxu0 0.0
    %848 = vmatpush1.xpose.msra.mxu0 0.0
    %849 = vmatprep.subr.mxu0 0.0
    %850 = vmatpush1.xpose.msra.mxu0 0.0
    %851 = vmatprep.subr.mxu0 0.0
    %852 = vmatpush1.xpose.msra.mxu0 0.0
    %853 = vmatprep.subr.mxu0 0.0
    %854 = vmatpush1.xpose.msra.mxu0 0.0
    %855 = vmatprep.subr.mxu0 0.0
    %856 = vmatpush1.xpose.msra.mxu0 0.0
    %857 = vmatprep.subr.mxu0 0.0
    %858 = vmatpush1.xpose.msra.mxu0 0.0
    %859 = vmatprep.subr.mxu0 0.0
    %860 = vmatpush1.xpose.msra.mxu0 0.0
    %861 = vmatprep.subr.mxu0 0.0
    %862 = vmatpush1.xpose.msra.mxu0 0.0
    %863 = vmatprep.subr.mxu0 0.0
    %864 = vmatpush1.xpose.msra.mxu0 0.0
    %865 = vmatprep.subr.mxu0 0.0
    %866 = vmatpush1.xpose.msra.mxu0 0.0
    %867 = vmatprep.subr.mxu0 0.0
    %868 = vmatpush1.xpose.msra.mxu0 0.0
    %869 = vmatprep.subr.mxu0 0.0
    %870 = vmatpush1.xpose.msra.mxu0 0.0
    %871 = vmatprep.subr.mxu0 0.0
    %872 = vmatpush1.xpose.msra.mxu0 0.0
    %873 = vmatprep.subr.mxu0 0.0
    %874 = vmatpush1.xpose.msra.mxu0 0.0
    %875 = vmatprep.subr.mxu0 0.0
    %876 = vmatpush1.xpose.msra.mxu0 0.0
    %877 = vmatprep.subr.mxu0 0.0
    %878 = vmatpush1.xpose.msra.mxu0 0.0
    %879 = vmatprep.subr.mxu0 0.0
    %880 = vmatpush1.xpose.msra.mxu0 0.0
    %881 = vmatprep.subr.mxu0 0.0
    %882 = vmatpush1.xpose.msra.mxu0 0.0
    %883 = vmatprep.subr.mxu0 0.0
    %884 = vmatpush1.xpose.msra.mxu0 0.0
    %885 = vmatprep.subr.mxu0 0.0
    %886 = vmatpush1.xpose.msra.mxu0 0.0
    %887 = vmatprep.subr.mxu0 0.0
    %888 = vmatpush1.xpose.msra.mxu0 0.0
    %889 = vmatprep.subr.mxu0 0.0
    %890 = vmatpush1.xpose.msra.mxu0 0.0
    %891 = vmatprep.subr.mxu0 0.0
    %892 = vmatpush1.xpose.msra.mxu0 0.0
    %893 = vmatprep.mubr.f32.mxu0 0.0
    %v894 = vand.u32 %v598, 4294901760
    %v895 = vsub.f32 %v598, %v894
    %v896 = vand.u32 %v895, 4294901760
    %897 = vmatmul.mubr.f32.gmra.mrb[0].mxu0 %v896
    %v898 = vpop.f32.mrb[0].mxu0
    %v899 = vadd.f32 %v825, %v898
    %v900 = vpop.f32.mrb[0].mxu0
    %901 = vdwg.mxu0
    %902 = vmatprep.subr.mxu0 0.0
    %v903 = vand.u32 %v600, 4294901760
    %v904 = vsub.f32 %v600, %v903
    %v905 = vand.u32 %v904, 4294901760
    %906 = vmatpush1.xpose.msra.mxu0 %v905
    %907 = vmatprep.subr.mxu0 0.0
    %908 = vmatpush1.xpose.msra.mxu0 0.0
    %909 = vmatprep.subr.mxu0 0.0
    %910 = vmatpush1.xpose.msra.mxu0 0.0
    %911 = vmatprep.subr.mxu0 0.0
    %912 = vmatpush1.xpose.msra.mxu0 0.0
    %913 = vmatprep.subr.mxu0 0.0
    %914 = vmatpush1.xpose.msra.mxu0 0.0
    %915 = vmatprep.subr.mxu0 0.0
    %916 = vmatpush1.xpose.msra.mxu0 0.0
    %917 = vmatprep.subr.mxu0 0.0
    %918 = vmatpush1.xpose.msra.mxu0 0.0
    %919 = vmatprep.subr.mxu0 0.0
    %920 = vmatpush1.xpose.msra.mxu0 0.0
    %921 = vmatprep.subr.mxu0 0.0
    %922 = vmatpush1.xpose.msra.mxu0 0.0
    %923 = vmatprep.subr.mxu0 0.0
    %924 = vmatpush1.xpose.msra.mxu0 0.0
    %925 = vmatprep.subr.mxu0 0.0
    %926 = vmatpush1.xpose.msra.mxu0 0.0
    %927 = vmatprep.subr.mxu0 0.0
    %928 = vmatpush1.xpose.msra.mxu0 0.0
    %929 = vmatprep.subr.mxu0 0.0
    %930 = vmatpush1.xpose.msra.mxu0 0.0
    %931 = vmatprep.subr.mxu0 0.0
    %932 = vmatpush1.xpose.msra.mxu0 0.0
    %933 = vmatprep.subr.mxu0 0.0
    %934 = vmatpush1.xpose.msra.mxu0 0.0
    %935 = vmatprep.subr.mxu0 0.0
    %936 = vmatpush1.xpose.msra.mxu0 0.0
    %937 = vmatprep.subr.mxu0 0.0
    %938 = vmatpush1.xpose.msra.mxu0 0.0
    %939 = vmatprep.subr.mxu0 0.0
    %940 = vmatpush1.xpose.msra.mxu0 0.0
    %941 = vmatprep.subr.mxu0 0.0
    %942 = vmatpush1.xpose.msra.mxu0 0.0
    %943 = vmatprep.subr.mxu0 0.0
    %944 = vmatpush1.xpose.msra.mxu0 0.0
    %945 = vmatprep.subr.mxu0 0.0
    %946 = vmatpush1.xpose.msra.mxu0 0.0
    %947 = vmatprep.subr.mxu0 0.0
    %948 = vmatpush1.xpose.msra.mxu0 0.0
    %949 = vmatprep.subr.mxu0 0.0
    %950 = vmatpush1.xpose.msra.mxu0 0.0
    %951 = vmatprep.subr.mxu0 0.0
    %952 = vmatpush1.xpose.msra.mxu0 0.0
    %953 = vmatprep.subr.mxu0 0.0
    %954 = vmatpush1.xpose.msra.mxu0 0.0
    %955 = vmatprep.subr.mxu0 0.0
    %956 = vmatpush1.xpose.msra.mxu0 0.0
    %957 = vmatprep.subr.mxu0 0.0
    %958 = vmatpush1.xpose.msra.mxu0 0.0
    %959 = vmatprep.subr.mxu0 0.0
    %960 = vmatpush1.xpose.msra.mxu0 0.0
    %961 = vmatprep.subr.mxu0 0.0
    %962 = vmatpush1.xpose.msra.mxu0 0.0
    %963 = vmatprep.subr.mxu0 0.0
    %964 = vmatpush1.xpose.msra.mxu0 0.0
    %965 = vmatprep.subr.mxu0 0.0
    %966 = vmatpush1.xpose.msra.mxu0 0.0
    %967 = vmatprep.subr.mxu0 0.0
    %968 = vmatpush1.xpose.msra.mxu0 0.0
    %969 = vmatprep.mubr.f32.mxu0 0.0
    %v970 = vand.u32 %v598, 4294901760
    %971 = vmatmul.mubr.f32.gmra.mrb[0].mxu0 %v970
    %v972 = vpop.f32.mrb[0].mxu0
    %v973 = vadd.f32 %v899, %v972
    %v974 = vpop.f32.mrb[0].mxu0
    %975 = vdwg.mxu0
    %976 = vmatprep.subr.mxu0 0.0
    %v977 = vand.u32 %v600, 4294901760
    %978 = vmatpush1.xpose.msra.mxu0 %v977
    %979 = vmatprep.subr.mxu0 0.0
    %980 = vmatpush1.xpose.msra.mxu0 0.0
    %981 = vmatprep.subr.mxu0 0.0
    %982 = vmatpush1.xpose.msra.mxu0 0.0
    %983 = vmatprep.subr.mxu0 0.0
    %984 = vmatpush1.xpose.msra.mxu0 0.0
    %985 = vmatprep.subr.mxu0 0.0
    %986 = vmatpush1.xpose.msra.mxu0 0.0
    %987 = vmatprep.subr.mxu0 0.0
    %988 = vmatpush1.xpose.msra.mxu0 0.0
    %989 = vmatprep.subr.mxu0 0.0
    %990 = vmatpush1.xpose.msra.mxu0 0.0
    %991 = vmatprep.subr.mxu0 0.0
    %992 = vmatpush1.xpose.msra.mxu0 0.0
    %993 = vmatprep.subr.mxu0 0.0
    %994 = vmatpush1.xpose.msra.mxu0 0.0
    %995 = vmatprep.subr.mxu0 0.0
    %996 = vmatpush1.xpose.msra.mxu0 0.0
    %997 = vmatprep.subr.mxu0 0.0
    %998 = vmatpush1.xpose.msra.mxu0 0.0
    %999 = vmatprep.subr.mxu0 0.0
    %1000 = vmatpush1.xpose.msra.mxu0 0.0
    %1001 = vmatprep.subr.mxu0 0.0
    %1002 = vmatpush1.xpose.msra.mxu0 0.0
    %1003 = vmatprep.subr.mxu0 0.0
    %1004 = vmatpush1.xpose.msra.mxu0 0.0
    %1005 = vmatprep.subr.mxu0 0.0
    %1006 = vmatpush1.xpose.msra.mxu0 0.0
    %1007 = vmatprep.subr.mxu0 0.0
    %1008 = vmatpush1.xpose.msra.mxu0 0.0
    %1009 = vmatprep.subr.mxu0 0.0
    %1010 = vmatpush1.xpose.msra.mxu0 0.0
    %1011 = vmatprep.subr.mxu0 0.0
    %1012 = vmatpush1.xpose.msra.mxu0 0.0
    %1013 = vmatprep.subr.mxu0 0.0
    %1014 = vmatpush1.xpose.msra.mxu0 0.0
    %1015 = vmatprep.subr.mxu0 0.0
    %1016 = vmatpush1.xpose.msra.mxu0 0.0
    %1017 = vmatprep.subr.mxu0 0.0
    %1018 = vmatpush1.xpose.msra.mxu0 0.0
    %1019 = vmatprep.subr.mxu0 0.0
    %1020 = vmatpush1.xpose.msra.mxu0 0.0
    %1021 = vmatprep.subr.mxu0 0.0
    %1022 = vmatpush1.xpose.msra.mxu0 0.0
    %1023 = vmatprep.subr.mxu0 0.0
    %1024 = vmatpush1.xpose.msra.mxu0 0.0
    %1025 = vmatprep.subr.mxu0 0.0
    %1026 = vmatpush1.xpose.msra.mxu0 0.0
    %1027 = vmatprep.subr.mxu0 0.0
    %1028 = vmatpush1.xpose.msra.mxu0 0.0
    %1029 = vmatprep.subr.mxu0 0.0
    %1030 = vmatpush1.xpose.msra.mxu0 0.0
    %1031 = vmatprep.subr.mxu0 0.0
    %1032 = vmatpush1.xpose.msra.mxu0 0.0
    %1033 = vmatprep.subr.mxu0 0.0
    %1034 = vmatpush1.xpose.msra.mxu0 0.0
    %1035 = vmatprep.subr.mxu0 0.0
    %1036 = vmatpush1.xpose.msra.mxu0 0.0
    %1037 = vmatprep.subr.mxu0 0.0
    %1038 = vmatpush1.xpose.msra.mxu0 0.0
    %1039 = vmatprep.subr.mxu0 0.0
    %1040 = vmatpush1.xpose.msra.mxu0 0.0
    %1041 = vmatprep.mubr.f32.mxu0 0.0
    %v1042 = vand.u32 %v598, 4294901760
    %1043 = vmatmul.mubr.f32.gmra.mrb[0].mxu0 %v1042
    %v1044 = vpop.f32.mrb[0].mxu0
    %v1045 = vadd.f32 %v973, %v1044
    %v1046 = vpop.f32.mrb[0].mxu0
    %1047 = vdwg.mxu0
    %1049 = vrot.lane.b32.xlu0 %v592, 96
    %v1050 = vpop.permute.xlu0 %1049
    %v1051 = vsel %vm60, %v592, 0
    %v1053 = vsel %vm60, %v1050, 0
    %1055 = vmatprep.subr.mxu0 0.0
    %v1056 = vand.u32 %v1053, 4294901760
    %1057 = vmatpush1.xpose.msra.mxu0 %v1056
    %1058 = vmatprep.subr.mxu0 0.0
    %1059 = vmatpush1.xpose.msra.mxu0 0.0
    %1060 = vmatprep.subr.mxu0 0.0
    %1061 = vmatpush1.xpose.msra.mxu0 0.0
    %1062 = vmatprep.subr.mxu0 0.0
    %1063 = vmatpush1.xpose.msra.mxu0 0.0
    %1064 = vmatprep.subr.mxu0 0.0
    %1065 = vmatpush1.xpose.msra.mxu0 0.0
    %1066 = vmatprep.subr.mxu0 0.0
    %1067 = vmatpush1.xpose.msra.mxu0 0.0
    %1068 = vmatprep.subr.mxu0 0.0
    %1069 = vmatpush1.xpose.msra.mxu0 0.0
    %1070 = vmatprep.subr.mxu0 0.0
    %1071 = vmatpush1.xpose.msra.mxu0 0.0
    %1072 = vmatprep.subr.mxu0 0.0
    %1073 = vmatpush1.xpose.msra.mxu0 0.0
    %1074 = vmatprep.subr.mxu0 0.0
    %1075 = vmatpush1.xpose.msra.mxu0 0.0
    %1076 = vmatprep.subr.mxu0 0.0
    %1077 = vmatpush1.xpose.msra.mxu0 0.0
    %1078 = vmatprep.subr.mxu0 0.0
    %1079 = vmatpush1.xpose.msra.mxu0 0.0
    %1080 = vmatprep.subr.mxu0 0.0
    %1081 = vmatpush1.xpose.msra.mxu0 0.0
    %1082 = vmatprep.subr.mxu0 0.0
    %1083 = vmatpush1.xpose.msra.mxu0 0.0
    %1084 = vmatprep.subr.mxu0 0.0
    %1085 = vmatpush1.xpose.msra.mxu0 0.0
    %1086 = vmatprep.subr.mxu0 0.0
    %1087 = vmatpush1.xpose.msra.mxu0 0.0
    %1088 = vmatprep.subr.mxu0 0.0
    %1089 = vmatpush1.xpose.msra.mxu0 0.0
    %1090 = vmatprep.subr.mxu0 0.0
    %1091 = vmatpush1.xpose.msra.mxu0 0.0
    %1092 = vmatprep.subr.mxu0 0.0
    %1093 = vmatpush1.xpose.msra.mxu0 0.0
    %1094 = vmatprep.subr.mxu0 0.0
    %1095 = vmatpush1.xpose.msra.mxu0 0.0
    %1096 = vmatprep.subr.mxu0 0.0
    %1097 = vmatpush1.xpose.msra.mxu0 0.0
    %1098 = vmatprep.subr.mxu0 0.0
    %1099 = vmatpush1.xpose.msra.mxu0 0.0
    %1100 = vmatprep.subr.mxu0 0.0
    %1101 = vmatpush1.xpose.msra.mxu0 0.0
    %1102 = vmatprep.subr.mxu0 0.0
    %1103 = vmatpush1.xpose.msra.mxu0 0.0
    %1104 = vmatprep.subr.mxu0 0.0
    %1105 = vmatpush1.xpose.msra.mxu0 0.0
    %1106 = vmatprep.subr.mxu0 0.0
    %1107 = vmatpush1.xpose.msra.mxu0 0.0
    %1108 = vmatprep.subr.mxu0 0.0
    %1109 = vmatpush1.xpose.msra.mxu0 0.0
    %1110 = vmatprep.subr.mxu0 0.0
    %1111 = vmatpush1.xpose.msra.mxu0 0.0
    %1112 = vmatprep.subr.mxu0 0.0
    %1113 = vmatpush1.xpose.msra.mxu0 0.0
    %1114 = vmatprep.subr.mxu0 0.0
    %1115 = vmatpush1.xpose.msra.mxu0 0.0
    %1116 = vmatprep.subr.mxu0 0.0
    %1117 = vmatpush1.xpose.msra.mxu0 0.0
    %1118 = vmatprep.subr.mxu0 0.0
    %1119 = vmatpush1.xpose.msra.mxu0 0.0
    %1120 = vmatprep.mubr.f32.mxu0 0.0
    %v1121 = vand.u32 %v1051, 4294901760
    %v1122 = vsub.f32 %v1051, %v1121
    %v1123 = vand.u32 %v1122, 4294901760
    %v1124 = vsub.f32 %v1122, %v1123
    %v1125 = vand.u32 %v1124, 4294901760
    %1126 = vmatmul.mubr.f32.gmra.mrb[0].mxu0 %v1125
    %v1127 = vpop.f32.mrb[0].mxu0
    %v1128 = vadd.f32 0.0, %v1127
    %v1129 = vpop.f32.mrb[0].mxu0
    %1130 = vdwg.mxu0
    %1131 = vmatprep.subr.mxu0 0.0
    %v1132 = vand.u32 %v1053, 4294901760
    %v1133 = vsub.f32 %v1053, %v1132
    %v1134 = vand.u32 %v1133, 4294901760
    %v1135 = vsub.f32 %v1133, %v1134
    %v1136 = vand.u32 %v1135, 4294901760
    %1137 = vmatpush1.xpose.msra.mxu0 %v1136
    %1138 = vmatprep.subr.mxu0 0.0
    %1139 = vmatpush1.xpose.msra.mxu0 0.0
    %1140 = vmatprep.subr.mxu0 0.0
    %1141 = vmatpush1.xpose.msra.mxu0 0.0
    %1142 = vmatprep.subr.mxu0 0.0
    %1143 = vmatpush1.xpose.msra.mxu0 0.0
    %1144 = vmatprep.subr.mxu0 0.0
    %1145 = vmatpush1.xpose.msra.mxu0 0.0
    %1146 = vmatprep.subr.mxu0 0.0
    %1147 = vmatpush1.xpose.msra.mxu0 0.0
    %1148 = vmatprep.subr.mxu0 0.0
    %1149 = vmatpush1.xpose.msra.mxu0 0.0
    %1150 = vmatprep.subr.mxu0 0.0
    %1151 = vmatpush1.xpose.msra.mxu0 0.0
    %1152 = vmatprep.subr.mxu0 0.0
    %1153 = vmatpush1.xpose.msra.mxu0 0.0
    %1154 = vmatprep.subr.mxu0 0.0
    %1155 = vmatpush1.xpose.msra.mxu0 0.0
    %1156 = vmatprep.subr.mxu0 0.0
    %1157 = vmatpush1.xpose.msra.mxu0 0.0
    %1158 = vmatprep.subr.mxu0 0.0
    %1159 = vmatpush1.xpose.msra.mxu0 0.0
    %1160 = vmatprep.subr.mxu0 0.0
    %1161 = vmatpush1.xpose.msra.mxu0 0.0
    %1162 = vmatprep.subr.mxu0 0.0
    %1163 = vmatpush1.xpose.msra.mxu0 0.0
    %1164 = vmatprep.subr.mxu0 0.0
    %1165 = vmatpush1.xpose.msra.mxu0 0.0
    %1166 = vmatprep.subr.mxu0 0.0
    %1167 = vmatpush1.xpose.msra.mxu0 0.0
    %1168 = vmatprep.subr.mxu0 0.0
    %1169 = vmatpush1.xpose.msra.mxu0 0.0
    %1170 = vmatprep.subr.mxu0 0.0
    %1171 = vmatpush1.xpose.msra.mxu0 0.0
    %1172 = vmatprep.subr.mxu0 0.0
    %1173 = vmatpush1.xpose.msra.mxu0 0.0
    %1174 = vmatprep.subr.mxu0 0.0
    %1175 = vmatpush1.xpose.msra.mxu0 0.0
    %1176 = vmatprep.subr.mxu0 0.0
    %1177 = vmatpush1.xpose.msra.mxu0 0.0
    %1178 = vmatprep.subr.mxu0 0.0
    %1179 = vmatpush1.xpose.msra.mxu0 0.0
    %1180 = vmatprep.subr.mxu0 0.0
    %1181 = vmatpush1.xpose.msra.mxu0 0.0
    %1182 = vmatprep.subr.mxu0 0.0
    %1183 = vmatpush1.xpose.msra.mxu0 0.0
    %1184 = vmatprep.subr.mxu0 0.0
    %1185 = vmatpush1.xpose.msra.mxu0 0.0
    %1186 = vmatprep.subr.mxu0 0.0
    %1187 = vmatpush1.xpose.msra.mxu0 0.0
    %1188 = vmatprep.subr.mxu0 0.0
    %1189 = vmatpush1.xpose.msra.mxu0 0.0
    %1190 = vmatprep.subr.mxu0 0.0
    %1191 = vmatpush1.xpose.msra.mxu0 0.0
    %1192 = vmatprep.subr.mxu0 0.0
    %1193 = vmatpush1.xpose.msra.mxu0 0.0
    %1194 = vmatprep.subr.mxu0 0.0
    %1195 = vmatpush1.xpose.msra.mxu0 0.0
    %1196 = vmatprep.subr.mxu0 0.0
    %1197 = vmatpush1.xpose.msra.mxu0 0.0
    %1198 = vmatprep.subr.mxu0 0.0
    %1199 = vmatpush1.xpose.msra.mxu0 0.0
    %1200 = vmatprep.mubr.f32.mxu0 0.0
    %v1201 = vand.u32 %v1051, 4294901760
    %1202 = vmatmul.mubr.f32.gmra.mrb[0].mxu0 %v1201
    %v1203 = vpop.f32.mrb[0].mxu0
    %v1204 = vadd.f32 %v1128, %v1203
    %v1205 = vpop.f32.mrb[0].mxu0
    %1206 = vdwg.mxu0
    %1207 = vmatprep.subr.mxu0 0.0
    %v1208 = vand.u32 %v1053, 4294901760
    %v1209 = vsub.f32 %v1053, %v1208
    %1210 = vmatpush1.xpose.msra.mxu0 %v1209
    %1211 = vmatprep.subr.mxu0 0.0
    %1212 = vmatpush1.xpose.msra.mxu0 0.0
    %1213 = vmatprep.subr.mxu0 0.0
    %1214 = vmatpush1.xpose.msra.mxu0 0.0
    %1215 = vmatprep.subr.mxu0 0.0
    %1216 = vmatpush1.xpose.msra.mxu0 0.0
    %1217 = vmatprep.subr.mxu0 0.0
    %1218 = vmatpush1.xpose.msra.mxu0 0.0
    %1219 = vmatprep.subr.mxu0 0.0
    %1220 = vmatpush1.xpose.msra.mxu0 0.0
    %1221 = vmatprep.subr.mxu0 0.0
    %1222 = vmatpush1.xpose.msra.mxu0 0.0
    %1223 = vmatprep.subr.mxu0 0.0
    %1224 = vmatpush1.xpose.msra.mxu0 0.0
    %1225 = vmatprep.subr.mxu0 0.0
    %1226 = vmatpush1.xpose.msra.mxu0 0.0
    %1227 = vmatprep.subr.mxu0 0.0
    %1228 = vmatpush1.xpose.msra.mxu0 0.0
    %1229 = vmatprep.subr.mxu0 0.0
    %1230 = vmatpush1.xpose.msra.mxu0 0.0
    %1231 = vmatprep.subr.mxu0 0.0
    %1232 = vmatpush1.xpose.msra.mxu0 0.0
    %1233 = vmatprep.subr.mxu0 0.0
    %1234 = vmatpush1.xpose.msra.mxu0 0.0
    %1235 = vmatprep.subr.mxu0 0.0
    %1236 = vmatpush1.xpose.msra.mxu0 0.0
    %1237 = vmatprep.subr.mxu0 0.0
    %1238 = vmatpush1.xpose.msra.mxu0 0.0
    %1239 = vmatprep.subr.mxu0 0.0
    %1240 = vmatpush1.xpose.msra.mxu0 0.0
    %1241 = vmatprep.subr.mxu0 0.0
    %1242 = vmatpush1.xpose.msra.mxu0 0.0
    %1243 = vmatprep.subr.mxu0 0.0
    %1244 = vmatpush1.xpose.msra.mxu0 0.0
    %1245 = vmatprep.subr.mxu0 0.0
    %1246 = vmatpush1.xpose.msra.mxu0 0.0
    %1247 = vmatprep.subr.mxu0 0.0
    %1248 = vmatpush1.xpose.msra.mxu0 0.0
    %1249 = vmatprep.subr.mxu0 0.0
    %1250 = vmatpush1.xpose.msra.mxu0 0.0
    %1251 = vmatprep.subr.mxu0 0.0
    %1252 = vmatpush1.xpose.msra.mxu0 0.0
    %1253 = vmatprep.subr.mxu0 0.0
    %1254 = vmatpush1.xpose.msra.mxu0 0.0
    %1255 = vmatprep.subr.mxu0 0.0
    %1256 = vmatpush1.xpose.msra.mxu0 0.0
    %1257 = vmatprep.subr.mxu0 0.0
    %1258 = vmatpush1.xpose.msra.mxu0 0.0
    %1259 = vmatprep.subr.mxu0 0.0
    %1260 = vmatpush1.xpose.msra.mxu0 0.0
    %1261 = vmatprep.subr.mxu0 0.0
    %1262 = vmatpush1.xpose.msra.mxu0 0.0
    %1263 = vmatprep.subr.mxu0 0.0
    %1264 = vmatpush1.xpose.msra.mxu0 0.0
    %1265 = vmatprep.subr.mxu0 0.0
    %1266 = vmatpush1.xpose.msra.mxu0 0.0
    %1267 = vmatprep.subr.mxu0 0.0
    %1268 = vmatpush1.xpose.msra.mxu0 0.0
    %1269 = vmatprep.subr.mxu0 0.0
    %1270 = vmatpush1.xpose.msra.mxu0 0.0
    %1271 = vmatprep.subr.mxu0 0.0
    %1272 = vmatpush1.xpose.msra.mxu0 0.0
    %1273 = vmatprep.mubr.f32.mxu0 0.0
    %v1274 = vand.u32 %v1051, 4294901760
    %v1275 = vsub.f32 %v1051, %v1274
    %1276 = vmatmul.mubr.f32.gmra.mrb[0].mxu0 %v1275
    %v1277 = vpop.f32.mrb[0].mxu0
    %v1278 = vadd.f32 %v1204, %v1277
    %v1279 = vpop.f32.mrb[0].mxu0
    %1280 = vdwg.mxu0
    %1281 = vmatprep.subr.mxu0 0.0
    %v1282 = vand.u32 %v1053, 4294901760
    %1283 = vmatpush1.xpose.msra.mxu0 %v1282
    %1284 = vmatprep.subr.mxu0 0.0
    %1285 = vmatpush1.xpose.msra.mxu0 0.0
    %1286 = vmatprep.subr.mxu0 0.0
    %1287 = vmatpush1.xpose.msra.mxu0 0.0
    %1288 = vmatprep.subr.mxu0 0.0
    %1289 = vmatpush1.xpose.msra.mxu0 0.0
    %1290 = vmatprep.subr.mxu0 0.0
    %1291 = vmatpush1.xpose.msra.mxu0 0.0
    %1292 = vmatprep.subr.mxu0 0.0
    %1293 = vmatpush1.xpose.msra.mxu0 0.0
    %1294 = vmatprep.subr.mxu0 0.0
    %1295 = vmatpush1.xpose.msra.mxu0 0.0
    %1296 = vmatprep.subr.mxu0 0.0
    %1297 = vmatpush1.xpose.msra.mxu0 0.0
    %1298 = vmatprep.subr.mxu0 0.0
    %1299 = vmatpush1.xpose.msra.mxu0 0.0
    %1300 = vmatprep.subr.mxu0 0.0
    %1301 = vmatpush1.xpose.msra.mxu0 0.0
    %1302 = vmatprep.subr.mxu0 0.0
    %1303 = vmatpush1.xpose.msra.mxu0 0.0
    %1304 = vmatprep.subr.mxu0 0.0
    %1305 = vmatpush1.xpose.msra.mxu0 0.0
    %1306 = vmatprep.subr.mxu0 0.0
    %1307 = vmatpush1.xpose.msra.mxu0 0.0
    %1308 = vmatprep.subr.mxu0 0.0
    %1309 = vmatpush1.xpose.msra.mxu0 0.0
    %1310 = vmatprep.subr.mxu0 0.0
    %1311 = vmatpush1.xpose.msra.mxu0 0.0
    %1312 = vmatprep.subr.mxu0 0.0
    %1313 = vmatpush1.xpose.msra.mxu0 0.0
    %1314 = vmatprep.subr.mxu0 0.0
    %1315 = vmatpush1.xpose.msra.mxu0 0.0
    %1316 = vmatprep.subr.mxu0 0.0
    %1317 = vmatpush1.xpose.msra.mxu0 0.0
    %1318 = vmatprep.subr.mxu0 0.0
    %1319 = vmatpush1.xpose.msra.mxu0 0.0
    %1320 = vmatprep.subr.mxu0 0.0
    %1321 = vmatpush1.xpose.msra.mxu0 0.0
    %1322 = vmatprep.subr.mxu0 0.0
    %1323 = vmatpush1.xpose.msra.mxu0 0.0
    %1324 = vmatprep.subr.mxu0 0.0
    %1325 = vmatpush1.xpose.msra.mxu0 0.0
    %1326 = vmatprep.subr.mxu0 0.0
    %1327 = vmatpush1.xpose.msra.mxu0 0.0
    %1328 = vmatprep.subr.mxu0 0.0
    %1329 = vmatpush1.xpose.msra.mxu0 0.0
    %1330 = vmatprep.subr.mxu0 0.0
    %1331 = vmatpush1.xpose.msra.mxu0 0.0
    %1332 = vmatprep.subr.mxu0 0.0
    %1333 = vmatpush1.xpose.msra.mxu0 0.0
    %1334 = vmatprep.subr.mxu0 0.0
    %1335 = vmatpush1.xpose.msra.mxu0 0.0
    %1336 = vmatprep.subr.mxu0 0.0
    %1337 = vmatpush1.xpose.msra.mxu0 0.0
    %1338 = vmatprep.subr.mxu0 0.0
    %1339 = vmatpush1.xpose.msra.mxu0 0.0
    %1340 = vmatprep.subr.mxu0 0.0
    %1341 = vmatpush1.xpose.msra.mxu0 0.0
    %1342 = vmatprep.subr.mxu0 0.0
    %1343 = vmatpush1.xpose.msra.mxu0 0.0
    %1344 = vmatprep.subr.mxu0 0.0
    %1345 = vmatpush1.xpose.msra.mxu0 0.0
    %1346 = vmatprep.mubr.f32.mxu0 0.0
    %v1347 = vand.u32 %v1051, 4294901760
    %v1348 = vsub.f32 %v1051, %v1347
    %v1349 = vand.u32 %v1348, 4294901760
    %1350 = vmatmul.mubr.f32.gmra.mrb[0].mxu0 %v1349
    %v1351 = vpop.f32.mrb[0].mxu0
    %v1352 = vadd.f32 %v1278, %v1351
    %v1353 = vpop.f32.mrb[0].mxu0
    %1354 = vdwg.mxu0
    %1355 = vmatprep.subr.mxu0 0.0
    %v1356 = vand.u32 %v1053, 4294901760
    %v1357 = vsub.f32 %v1053, %v1356
    %v1358 = vand.u32 %v1357, 4294901760
    %1359 = vmatpush1.xpose.msra.mxu0 %v1358
    %1360 = vmatprep.subr.mxu0 0.0
    %1361 = vmatpush1.xpose.msra.mxu0 0.0
    %1362 = vmatprep.subr.mxu0 0.0
    %1363 = vmatpush1.xpose.msra.mxu0 0.0
    %1364 = vmatprep.subr.mxu0 0.0
    %1365 = vmatpush1.xpose.msra.mxu0 0.0
    %1366 = vmatprep.subr.mxu0 0.0
    %1367 = vmatpush1.xpose.msra.mxu0 0.0
    %1368 = vmatprep.subr.mxu0 0.0
    %1369 = vmatpush1.xpose.msra.mxu0 0.0
    %1370 = vmatprep.subr.mxu0 0.0
    %1371 = vmatpush1.xpose.msra.mxu0 0.0
    %1372 = vmatprep.subr.mxu0 0.0
    %1373 = vmatpush1.xpose.msra.mxu0 0.0
    %1374 = vmatprep.subr.mxu0 0.0
    %1375 = vmatpush1.xpose.msra.mxu0 0.0
    %1376 = vmatprep.subr.mxu0 0.0
    %1377 = vmatpush1.xpose.msra.mxu0 0.0
    %1378 = vmatprep.subr.mxu0 0.0
    %1379 = vmatpush1.xpose.msra.mxu0 0.0
    %1380 = vmatprep.subr.mxu0 0.0
    %1381 = vmatpush1.xpose.msra.mxu0 0.0
    %1382 = vmatprep.subr.mxu0 0.0
    %1383 = vmatpush1.xpose.msra.mxu0 0.0
    %1384 = vmatprep.subr.mxu0 0.0
    %1385 = vmatpush1.xpose.msra.mxu0 0.0
    %1386 = vmatprep.subr.mxu0 0.0
    %1387 = vmatpush1.xpose.msra.mxu0 0.0
    %1388 = vmatprep.subr.mxu0 0.0
    %1389 = vmatpush1.xpose.msra.mxu0 0.0
    %1390 = vmatprep.subr.mxu0 0.0
    %1391 = vmatpush1.xpose.msra.mxu0 0.0
    %1392 = vmatprep.subr.mxu0 0.0
    %1393 = vmatpush1.xpose.msra.mxu0 0.0
    %1394 = vmatprep.subr.mxu0 0.0
    %1395 = vmatpush1.xpose.msra.mxu0 0.0
    %1396 = vmatprep.subr.mxu0 0.0
    %1397 = vmatpush1.xpose.msra.mxu0 0.0
    %1398 = vmatprep.subr.mxu0 0.0
    %1399 = vmatpush1.xpose.msra.mxu0 0.0
    %1400 = vmatprep.subr.mxu0 0.0
    %1401 = vmatpush1.xpose.msra.mxu0 0.0
    %1402 = vmatprep.subr.mxu0 0.0
    %1403 = vmatpush1.xpose.msra.mxu0 0.0
    %1404 = vmatprep.subr.mxu0 0.0
    %1405 = vmatpush1.xpose.msra.mxu0 0.0
    %1406 = vmatprep.subr.mxu0 0.0
    %1407 = vmatpush1.xpose.msra.mxu0 0.0
    %1408 = vmatprep.subr.mxu0 0.0
    %1409 = vmatpush1.xpose.msra.mxu0 0.0
    %1410 = vmatprep.subr.mxu0 0.0
    %1411 = vmatpush1.xpose.msra.mxu0 0.0
    %1412 = vmatprep.subr.mxu0 0.0
    %1413 = vmatpush1.xpose.msra.mxu0 0.0
    %1414 = vmatprep.subr.mxu0 0.0
    %1415 = vmatpush1.xpose.msra.mxu0 0.0
    %1416 = vmatprep.subr.mxu0 0.0
    %1417 = vmatpush1.xpose.msra.mxu0 0.0
    %1418 = vmatprep.subr.mxu0 0.0
    %1419 = vmatpush1.xpose.msra.mxu0 0.0
    %1420 = vmatprep.subr.mxu0 0.0
    %1421 = vmatpush1.xpose.msra.mxu0 0.0
    %1422 = vmatprep.mubr.f32.mxu0 0.0
    %v1423 = vand.u32 %v1051, 4294901760
    %1424 = vmatmul.mubr.f32.gmra.mrb[0].mxu0 %v1423
    %v1425 = vpop.f32.mrb[0].mxu0
    %v1426 = vadd.f32 %v1352, %v1425
    %v1427 = vpop.f32.mrb[0].mxu0
    %1428 = vdwg.mxu0
    %1429 = vmatprep.subr.mxu0 0.0
    %v1430 = vand.u32 %v1053, 4294901760
    %1431 = vmatpush1.xpose.msra.mxu0 %v1430
    %1432 = vmatprep.subr.mxu0 0.0
    %1433 = vmatpush1.xpose.msra.mxu0 0.0
    %1434 = vmatprep.subr.mxu0 0.0
    %1435 = vmatpush1.xpose.msra.mxu0 0.0
    %1436 = vmatprep.subr.mxu0 0.0
    %1437 = vmatpush1.xpose.msra.mxu0 0.0
    %1438 = vmatprep.subr.mxu0 0.0
    %1439 = vmatpush1.xpose.msra.mxu0 0.0
    %1440 = vmatprep.subr.mxu0 0.0
    %1441 = vmatpush1.xpose.msra.mxu0 0.0
    %1442 = vmatprep.subr.mxu0 0.0
    %1443 = vmatpush1.xpose.msra.mxu0 0.0
    %1444 = vmatprep.subr.mxu0 0.0
    %1445 = vmatpush1.xpose.msra.mxu0 0.0
    %1446 = vmatprep.subr.mxu0 0.0
    %1447 = vmatpush1.xpose.msra.mxu0 0.0
    %1448 = vmatprep.subr.mxu0 0.0
    %1449 = vmatpush1.xpose.msra.mxu0 0.0
    %1450 = vmatprep.subr.mxu0 0.0
    %1451 = vmatpush1.xpose.msra.mxu0 0.0
    %1452 = vmatprep.subr.mxu0 0.0
    %1453 = vmatpush1.xpose.msra.mxu0 0.0
    %1454 = vmatprep.subr.mxu0 0.0
    %1455 = vmatpush1.xpose.msra.mxu0 0.0
    %1456 = vmatprep.subr.mxu0 0.0
    %1457 = vmatpush1.xpose.msra.mxu0 0.0
    %1458 = vmatprep.subr.mxu0 0.0
    %1459 = vmatpush1.xpose.msra.mxu0 0.0
    %1460 = vmatprep.subr.mxu0 0.0
    %1461 = vmatpush1.xpose.msra.mxu0 0.0
    %1462 = vmatprep.subr.mxu0 0.0
    %1463 = vmatpush1.xpose.msra.mxu0 0.0
    %1464 = vmatprep.subr.mxu0 0.0
    %1465 = vmatpush1.xpose.msra.mxu0 0.0
    %1466 = vmatprep.subr.mxu0 0.0
    %1467 = vmatpush1.xpose.msra.mxu0 0.0
    %1468 = vmatprep.subr.mxu0 0.0
    %1469 = vmatpush1.xpose.msra.mxu0 0.0
    %1470 = vmatprep.subr.mxu0 0.0
    %1471 = vmatpush1.xpose.msra.mxu0 0.0
    %1472 = vmatprep.subr.mxu0 0.0
    %1473 = vmatpush1.xpose.msra.mxu0 0.0
    %1474 = vmatprep.subr.mxu0 0.0
    %1475 = vmatpush1.xpose.msra.mxu0 0.0
    %1476 = vmatprep.subr.mxu0 0.0
    %1477 = vmatpush1.xpose.msra.mxu0 0.0
    %1478 = vmatprep.subr.mxu0 0.0
    %1479 = vmatpush1.xpose.msra.mxu0 0.0
    %1480 = vmatprep.subr.mxu0 0.0
    %1481 = vmatpush1.xpose.msra.mxu0 0.0
    %1482 = vmatprep.subr.mxu0 0.0
    %1483 = vmatpush1.xpose.msra.mxu0 0.0
    %1484 = vmatprep.subr.mxu0 0.0
    %1485 = vmatpush1.xpose.msra.mxu0 0.0
    %1486 = vmatprep.subr.mxu0 0.0
    %1487 = vmatpush1.xpose.msra.mxu0 0.0
    %1488 = vmatprep.subr.mxu0 0.0
    %1489 = vmatpush1.xpose.msra.mxu0 0.0
    %1490 = vmatprep.subr.mxu0 0.0
    %1491 = vmatpush1.xpose.msra.mxu0 0.0
    %1492 = vmatprep.subr.mxu0 0.0
    %1493 = vmatpush1.xpose.msra.mxu0 0.0
    %1494 = vmatprep.mubr.f32.mxu0 0.0
    %v1495 = vand.u32 %v1051, 4294901760
    %1496 = vmatmul.mubr.f32.gmra.mrb[0].mxu0 %v1495
    %v1497 = vpop.f32.mrb[0].mxu0
    %v1498 = vadd.f32 %v1426, %v1497
    %v1499 = vpop.f32.mrb[0].mxu0
    %1500 = vdwg.mxu0
    %vm1501 = vcmask 64512
    %v1502 = vsel %vm1501, %v1045, -inf
    %1503 = vmax.xlane.f32.xlu0 %v1502
    %v1504 = vpop.xlane.xlu0 %1503
    %v1505 = vsel %vm1501, %v1498, -inf
    %1506 = vmax.xlane.f32.xlu0 %v1505
    %v1507 = vpop.xlane.xlu0 %1506
    %v1508 = vsub.f32 %v1045, %v1504
    %v1509 = vsub.f32 %v1498, %v1507
    %v1510 = vmul.f32 %v1508, 1.442695
    %v1511 = vpow.pop %v1510
    %v1512 = vmul.f32 %v1509, 1.442695
    %v1513 = vpow.pop %v1512
    %v1514 = vsel %vm1501, %v1511, 0.0
    %1515 = vadd.xlane.f32.xlu0 %v1514
    %v1516 = vpop.xlane.xlu0 %1515
    %v1517 = vsel %vm1501, %v1513, 0.0
    %1518 = vadd.xlane.f32.xlu0 %v1517
    %v1519 = vpop.xlane.xlu0 %1518
    %v1520 = vrcp.pop %v1516
    %v1521 = vmul.f32 %v1511, %v1520
    %v1522 = vrcp.pop %v1519
    %v1523 = vmul.f32 %v1513, %v1522
    %1524 = vrot.lane.b32.xlu0 %v586, 64
    %v1525 = vpop.permute.xlu0 %1524
    %v1528 = vsel %vm1501, %v1521, 0
    %1530 = vmatprep.subr.mxu0 0.0
    %v1531 = vand.u32 %v1525, 4294901760
    %1532 = vmatpush1.msra.mxu0 %v1531
    %1533 = vmatprep.subr.mxu0 0.0
    %1534 = vmatpush1.msra.mxu0 0.0
    %1535 = vmatprep.subr.mxu0 0.0
    %1536 = vmatpush1.msra.mxu0 0.0
    %1537 = vmatprep.subr.mxu0 0.0
    %1538 = vmatpush1.msra.mxu0 0.0
    %1539 = vmatprep.subr.mxu0 0.0
    %1540 = vmatpush1.msra.mxu0 0.0
    %1541 = vmatprep.subr.mxu0 0.0
    %1542 = vmatpush1.msra.mxu0 0.0
    %1543 = vmatprep.subr.mxu0 0.0
    %1544 = vmatpush1.msra.mxu0 0.0
    %1545 = vmatprep.subr.mxu0 0.0
    %1546 = vmatpush1.msra.mxu0 0.0
    %1547 = vmatprep.subr.mxu0 0.0
    %1548 = vmatpush1.msra.mxu0 0.0
    %1549 = vmatprep.subr.mxu0 0.0
    %1550 = vmatpush1.msra.mxu0 0.0
    %1551 = vmatprep.subr.mxu0 0.0
    %1552 = vmatpush1.msra.mxu0 0.0
    %1553 = vmatprep.subr.mxu0 0.0
    %1554 = vmatpush1.msra.mxu0 0.0
    %1555 = vmatprep.subr.mxu0 0.0
    %1556 = vmatpush1.msra.mxu0 0.0
    %1557 = vmatprep.subr.mxu0 0.0
    %1558 = vmatpush1.msra.mxu0 0.0
    %1559 = vmatprep.subr.mxu0 0.0
    %1560 = vmatpush1.msra.mxu0 0.0
    %1561 = vmatprep.subr.mxu0 0.0
    %1562 = vmatpush1.msra.mxu0 0.0
    %1563 = vmatprep.subr.mxu0 0.0
    %1564 = vmatpush1.msra.mxu0 0.0
    %1565 = vmatprep.subr.mxu0 0.0
    %1566 = vmatpush1.msra.mxu0 0.0
    %1567 = vmatprep.subr.mxu0 0.0
    %1568 = vmatpush1.msra.mxu0 0.0
    %1569 = vmatprep.subr.mxu0 0.0
    %1570 = vmatpush1.msra.mxu0 0.0
    %1571 = vmatprep.subr.mxu0 0.0
    %1572 = vmatpush1.msra.mxu0 0.0
    %1573 = vmatprep.subr.mxu0 0.0
    %1574 = vmatpush1.msra.mxu0 0.0
    %1575 = vmatprep.subr.mxu0 0.0
    %1576 = vmatpush1.msra.mxu0 0.0
    %1577 = vmatprep.subr.mxu0 0.0
    %1578 = vmatpush1.msra.mxu0 0.0
    %1579 = vmatprep.subr.mxu0 0.0
    %1580 = vmatpush1.msra.mxu0 0.0
    %1581 = vmatprep.subr.mxu0 0.0
    %1582 = vmatpush1.msra.mxu0 0.0
    %1583 = vmatprep.subr.mxu0 0.0
    %1584 = vmatpush1.msra.mxu0 0.0
    %1585 = vmatprep.subr.mxu0 0.0
    %1586 = vmatpush1.msra.mxu0 0.0
    %1587 = vmatprep.subr.mxu0 0.0
    %1588 = vmatpush1.msra.mxu0 0.0
    %1589 = vmatprep.subr.mxu0 0.0
    %1590 = vmatpush1.msra.mxu0 0.0
    %1591 = vmatprep.subr.mxu0 0.0
    %1592 = vmatpush1.msra.mxu0 0.0
    %1593 = vmatprep.subr.mxu0 0.0
    %1594 = vmatpush1.msra.mxu0 0.0
    %1595 = vmatprep.mubr.f32.mxu0 0.0
    %v1596 = vand.u32 %v1528, 4294901760
    %v1597 = vsub.f32 %v1528, %v1596
    %v1598 = vand.u32 %v1597, 4294901760
    %v1599 = vsub.f32 %v1597, %v1598
    %v1600 = vand.u32 %v1599, 4294901760
    %1601 = vmatmul.mubr.f32.gmra.mrb[0].mxu0 %v1600
    %v1602 = vpop.f32.mrb[0].mxu0
    %v1603 = vadd.f32 0.0, %v1602
    %v1604 = vpop.f32.mrb[0].mxu0
    %1605 = vdwg.mxu0
    %1606 = vmatprep.subr.mxu0 0.0
    %v1607 = vand.u32 %v1525, 4294901760
    %v1608 = vsub.f32 %v1525, %v1607
    %v1609 = vand.u32 %v1608, 4294901760
    %v1610 = vsub.f32 %v1608, %v1609
    %v1611 = vand.u32 %v1610, 4294901760
    %1612 = vmatpush1.msra.mxu0 %v1611
    %1613 = vmatprep.subr.mxu0 0.0
    %1614 = vmatpush1.msra.mxu0 0.0
    %1615 = vmatprep.subr.mxu0 0.0
    %1616 = vmatpush1.msra.mxu0 0.0
    %1617 = vmatprep.subr.mxu0 0.0
    %1618 = vmatpush1.msra.mxu0 0.0
    %1619 = vmatprep.subr.mxu0 0.0
    %1620 = vmatpush1.msra.mxu0 0.0
    %1621 = vmatprep.subr.mxu0 0.0
    %1622 = vmatpush1.msra.mxu0 0.0
    %1623 = vmatprep.subr.mxu0 0.0
    %1624 = vmatpush1.msra.mxu0 0.0
    %1625 = vmatprep.subr.mxu0 0.0
    %1626 = vmatpush1.msra.mxu0 0.0
    %1627 = vmatprep.subr.mxu0 0.0
    %1628 = vmatpush1.msra.mxu0 0.0
    %1629 = vmatprep.subr.mxu0 0.0
    %1630 = vmatpush1.msra.mxu0 0.0
    %1631 = vmatprep.subr.mxu0 0.0
    %1632 = vmatpush1.msra.mxu0 0.0
    %1633 = vmatprep.subr.mxu0 0.0
    %1634 = vmatpush1.msra.mxu0 0.0
    %1635 = vmatprep.subr.mxu0 0.0
    %1636 = vmatpush1.msra.mxu0 0.0
    %1637 = vmatprep.subr.mxu0 0.0
    %1638 = vmatpush1.msra.mxu0 0.0
    %1639 = vmatprep.subr.mxu0 0.0
    %1640 = vmatpush1.msra.mxu0 0.0
    %1641 = vmatprep.subr.mxu0 0.0
    %1642 = vmatpush1.msra.mxu0 0.0
    %1643 = vmatprep.subr.mxu0 0.0
    %1644 = vmatpush1.msra.mxu0 0.0
    %1645 = vmatprep.subr.mxu0 0.0
    %1646 = vmatpush1.msra.mxu0 0.0
    %1647 = vmatprep.subr.mxu0 0.0
    %1648 = vmatpush1.msra.mxu0 0.0
    %1649 = vmatprep.subr.mxu0 0.0
    %1650 = vmatpush1.msra.mxu0 0.0
    %1651 = vmatprep.subr.mxu0 0.0
    %1652 = vmatpush1.msra.mxu0 0.0
    %1653 = vmatprep.subr.mxu0 0.0
    %1654 = vmatpush1.msra.mxu0 0.0
    %1655 = vmatprep.subr.mxu0 0.0
    %1656 = vmatpush1.msra.mxu0 0.0
    %1657 = vmatprep.subr.mxu0 0.0
    %1658 = vmatpush1.msra.mxu0 0.0
    %1659 = vmatprep.subr.mxu0 0.0
    %1660 = vmatpush1.msra.mxu0 0.0
    %1661 = vmatprep.subr.mxu0 0.0
    %1662 = vmatpush1.msra.mxu0 0.0
    %1663 = vmatprep.subr.mxu0 0.0
    %1664 = vmatpush1.msra.mxu0 0.0
    %1665 = vmatprep.subr.mxu0 0.0
    %1666 = vmatpush1.msra.mxu0 0.0
    %1667 = vmatprep.subr.mxu0 0.0
    %1668 = vmatpush1.msra.mxu0 0.0
    %1669 = vmatprep.subr.mxu0 0.0
    %1670 = vmatpush1.msra.mxu0 0.0
    %1671 = vmatprep.subr.mxu0 0.0
    %1672 = vmatpush1.msra.mxu0 0.0
    %1673 = vmatprep.subr.mxu0 0.0
    %1674 = vmatpush1.msra.mxu0 0.0
    %1675 = vmatprep.mubr.f32.mxu0 0.0
    %v1676 = vand.u32 %v1528, 4294901760
    %1677 = vmatmul.mubr.f32.gmra.mrb[0].mxu0 %v1676
    %v1678 = vpop.f32.mrb[0].mxu0
    %v1679 = vadd.f32 %v1603, %v1678
    %v1680 = vpop.f32.mrb[0].mxu0
    %1681 = vdwg.mxu0
    %1682 = vmatprep.subr.mxu0 0.0
    %v1683 = vand.u32 %v1525, 4294901760
    %v1684 = vsub.f32 %v1525, %v1683
    %1685 = vmatpush1.msra.mxu0 %v1684
    %1686 = vmatprep.subr.mxu0 0.0
    %1687 = vmatpush1.msra.mxu0 0.0
    %1688 = vmatprep.subr.mxu0 0.0
    %1689 = vmatpush1.msra.mxu0 0.0
    %1690 = vmatprep.subr.mxu0 0.0
    %1691 = vmatpush1.msra.mxu0 0.0
    %1692 = vmatprep.subr.mxu0 0.0
    %1693 = vmatpush1.msra.mxu0 0.0
    %1694 = vmatprep.subr.mxu0 0.0
    %1695 = vmatpush1.msra.mxu0 0.0
    %1696 = vmatprep.subr.mxu0 0.0
    %1697 = vmatpush1.msra.mxu0 0.0
    %1698 = vmatprep.subr.mxu0 0.0
    %1699 = vmatpush1.msra.mxu0 0.0
    %1700 = vmatprep.subr.mxu0 0.0
    %1701 = vmatpush1.msra.mxu0 0.0
    %1702 = vmatprep.subr.mxu0 0.0
    %1703 = vmatpush1.msra.mxu0 0.0
    %1704 = vmatprep.subr.mxu0 0.0
    %1705 = vmatpush1.msra.mxu0 0.0
    %1706 = vmatprep.subr.mxu0 0.0
    %1707 = vmatpush1.msra.mxu0 0.0
    %1708 = vmatprep.subr.mxu0 0.0
    %1709 = vmatpush1.msra.mxu0 0.0
    %1710 = vmatprep.subr.mxu0 0.0
    %1711 = vmatpush1.msra.mxu0 0.0
    %1712 = vmatprep.subr.mxu0 0.0
    %1713 = vmatpush1.msra.mxu0 0.0
    %1714 = vmatprep.subr.mxu0 0.0
    %1715 = vmatpush1.msra.mxu0 0.0
    %1716 = vmatprep.subr.mxu0 0.0
    %1717 = vmatpush1.msra.mxu0 0.0
    %1718 = vmatprep.subr.mxu0 0.0
    %1719 = vmatpush1.msra.mxu0 0.0
    %1720 = vmatprep.subr.mxu0 0.0
    %1721 = vmatpush1.msra.mxu0 0.0
    %1722 = vmatprep.subr.mxu0 0.0
    %1723 = vmatpush1.msra.mxu0 0.0
    %1724 = vmatprep.subr.mxu0 0.0
    %1725 = vmatpush1.msra.mxu0 0.0
    %1726 = vmatprep.subr.mxu0 0.0
    %1727 = vmatpush1.msra.mxu0 0.0
    %1728 = vmatprep.subr.mxu0 0.0
    %1729 = vmatpush1.msra.mxu0 0.0
    %1730 = vmatprep.subr.mxu0 0.0
    %1731 = vmatpush1.msra.mxu0 0.0
    %1732 = vmatprep.subr.mxu0 0.0
    %1733 = vmatpush1.msra.mxu0 0.0
    %1734 = vmatprep.subr.mxu0 0.0
    %1735 = vmatpush1.msra.mxu0 0.0
    %1736 = vmatprep.subr.mxu0 0.0
    %1737 = vmatpush1.msra.mxu0 0.0
    %1738 = vmatprep.subr.mxu0 0.0
    %1739 = vmatpush1.msra.mxu0 0.0
    %1740 = vmatprep.subr.mxu0 0.0
    %1741 = vmatpush1.msra.mxu0 0.0
    %1742 = vmatprep.subr.mxu0 0.0
    %1743 = vmatpush1.msra.mxu0 0.0
    %1744 = vmatprep.subr.mxu0 0.0
    %1745 = vmatpush1.msra.mxu0 0.0
    %1746 = vmatprep.subr.mxu0 0.0
    %1747 = vmatpush1.msra.mxu0 0.0
    %1748 = vmatprep.mubr.f32.mxu0 0.0
    %v1749 = vand.u32 %v1528, 4294901760
    %v1750 = vsub.f32 %v1528, %v1749
    %1751 = vmatmul.mubr.f32.gmra.mrb[0].mxu0 %v1750
    %v1752 = vpop.f32.mrb[0].mxu0
    %v1753 = vadd.f32 %v1679, %v1752
    %v1754 = vpop.f32.mrb[0].mxu0
    %1755 = vdwg.mxu0
    %1756 = vmatprep.subr.mxu0 0.0
    %v1757 = vand.u32 %v1525, 4294901760
    %1758 = vmatpush1.msra.mxu0 %v1757
    %1759 = vmatprep.subr.mxu0 0.0
    %1760 = vmatpush1.msra.mxu0 0.0
    %1761 = vmatprep.subr.mxu0 0.0
    %1762 = vmatpush1.msra.mxu0 0.0
    %1763 = vmatprep.subr.mxu0 0.0
    %1764 = vmatpush1.msra.mxu0 0.0
    %1765 = vmatprep.subr.mxu0 0.0
    %1766 = vmatpush1.msra.mxu0 0.0
    %1767 = vmatprep.subr.mxu0 0.0
    %1768 = vmatpush1.msra.mxu0 0.0
    %1769 = vmatprep.subr.mxu0 0.0
    %1770 = vmatpush1.msra.mxu0 0.0
    %1771 = vmatprep.subr.mxu0 0.0
    %1772 = vmatpush1.msra.mxu0 0.0
    %1773 = vmatprep.subr.mxu0 0.0
    %1774 = vmatpush1.msra.mxu0 0.0
    %1775 = vmatprep.subr.mxu0 0.0
    %1776 = vmatpush1.msra.mxu0 0.0
    %1777 = vmatprep.subr.mxu0 0.0
    %1778 = vmatpush1.msra.mxu0 0.0
    %1779 = vmatprep.subr.mxu0 0.0
    %1780 = vmatpush1.msra.mxu0 0.0
    %1781 = vmatprep.subr.mxu0 0.0
    %1782 = vmatpush1.msra.mxu0 0.0
    %1783 = vmatprep.subr.mxu0 0.0
    %1784 = vmatpush1.msra.mxu0 0.0
    %1785 = vmatprep.subr.mxu0 0.0
    %1786 = vmatpush1.msra.mxu0 0.0
    %1787 = vmatprep.subr.mxu0 0.0
    %1788 = vmatpush1.msra.mxu0 0.0
    %1789 = vmatprep.subr.mxu0 0.0
    %1790 = vmatpush1.msra.mxu0 0.0
    %1791 = vmatprep.subr.mxu0 0.0
    %1792 = vmatpush1.msra.mxu0 0.0
    %1793 = vmatprep.subr.mxu0 0.0
    %1794 = vmatpush1.msra.mxu0 0.0
    %1795 = vmatprep.subr.mxu0 0.0
    %1796 = vmatpush1.msra.mxu0 0.0
    %1797 = vmatprep.subr.mxu0 0.0
    %1798 = vmatpush1.msra.mxu0 0.0
    %1799 = vmatprep.subr.mxu0 0.0
    %1800 = vmatpush1.msra.mxu0 0.0
    %1801 = vmatprep.subr.mxu0 0.0
    %1802 = vmatpush1.msra.mxu0 0.0
    %1803 = vmatprep.subr.mxu0 0.0
    %1804 = vmatpush1.msra.mxu0 0.0
    %1805 = vmatprep.subr.mxu0 0.0
    %1806 = vmatpush1.msra.mxu0 0.0
    %1807 = vmatprep.subr.mxu0 0.0
    %1808 = vmatpush1.msra.mxu0 0.0
    %1809 = vmatprep.subr.mxu0 0.0
    %1810 = vmatpush1.msra.mxu0 0.0
    %1811 = vmatprep.subr.mxu0 0.0
    %1812 = vmatpush1.msra.mxu0 0.0
    %1813 = vmatprep.subr.mxu0 0.0
    %1814 = vmatpush1.msra.mxu0 0.0
    %1815 = vmatprep.subr.mxu0 0.0
    %1816 = vmatpush1.msra.mxu0 0.0
    %1817 = vmatprep.subr.mxu0 0.0
    %1818 = vmatpush1.msra.mxu0 0.0
    %1819 = vmatprep.subr.mxu0 0.0
    %1820 = vmatpush1.msra.mxu0 0.0
    %1821 = vmatprep.mubr.f32.mxu0 0.0
    %v1822 = vand.u32 %v1528, 4294901760
    %v1823 = vsub.f32 %v1528, %v1822
    %v1824 = vand.u32 %v1823, 4294901760
    %1825 = vmatmul.mubr.f32.gmra.mrb[0].mxu0 %v1824
    %v1826 = vpop.f32.mrb[0].mxu0
    %v1827 = vadd.f32 %v1753, %v1826
    %v1828 = vpop.f32.mrb[0].mxu0
    %1829 = vdwg.mxu0
    %1830 = vmatprep.subr.mxu0 0.0
    %v1831 = vand.u32 %v1525, 4294901760
    %v1832 = vsub.f32 %v1525, %v1831
    %v1833 = vand.u32 %v1832, 4294901760
    %1834 = vmatpush1.msra.mxu0 %v1833
    %1835 = vmatprep.subr.mxu0 0.0
    %1836 = vmatpush1.msra.mxu0 0.0
    %1837 = vmatprep.subr.mxu0 0.0
    %1838 = vmatpush1.msra.mxu0 0.0
    %1839 = vmatprep.subr.mxu0 0.0
    %1840 = vmatpush1.msra.mxu0 0.0
    %1841 = vmatprep.subr.mxu0 0.0
    %1842 = vmatpush1.msra.mxu0 0.0
    %1843 = vmatprep.subr.mxu0 0.0
    %1844 = vmatpush1.msra.mxu0 0.0
    %1845 = vmatprep.subr.mxu0 0.0
    %1846 = vmatpush1.msra.mxu0 0.0
    %1847 = vmatprep.subr.mxu0 0.0
    %1848 = vmatpush1.msra.mxu0 0.0
    %1849 = vmatprep.subr.mxu0 0.0
    %1850 = vmatpush1.msra.mxu0 0.0
    %1851 = vmatprep.subr.mxu0 0.0
    %1852 = vmatpush1.msra.mxu0 0.0
    %1853 = vmatprep.subr.mxu0 0.0
    %1854 = vmatpush1.msra.mxu0 0.0
    %1855 = vmatprep.subr.mxu0 0.0
    %1856 = vmatpush1.msra.mxu0 0.0
    %1857 = vmatprep.subr.mxu0 0.0
    %1858 = vmatpush1.msra.mxu0 0.0
    %1859 = vmatprep.subr.mxu0 0.0
    %1860 = vmatpush1.msra.mxu0 0.0
    %1861 = vmatprep.subr.mxu0 0.0
    %1862 = vmatpush1.msra.mxu0 0.0
    %1863 = vmatprep.subr.mxu0 0.0
    %1864 = vmatpush1.msra.mxu0 0.0
    %1865 = vmatprep.subr.mxu0 0.0
    %1866 = vmatpush1.msra.mxu0 0.0
    %1867 = vmatprep.subr.mxu0 0.0
    %1868 = vmatpush1.msra.mxu0 0.0
    %1869 = vmatprep.subr.mxu0 0.0
    %1870 = vmatpush1.msra.mxu0 0.0
    %1871 = vmatprep.subr.mxu0 0.0
    %1872 = vmatpush1.msra.mxu0 0.0
    %1873 = vmatprep.subr.mxu0 0.0
    %1874 = vmatpush1.msra.mxu0 0.0
    %1875 = vmatprep.subr.mxu0 0.0
    %1876 = vmatpush1.msra.mxu0 0.0
    %1877 = vmatprep.subr.mxu0 0.0
    %1878 = vmatpush1.msra.mxu0 0.0
    %1879 = vmatprep.subr.mxu0 0.0
    %1880 = vmatpush1.msra.mxu0 0.0
    %1881 = vmatprep.subr.mxu0 0.0
    %1882 = vmatpush1.msra.mxu0 0.0
    %1883 = vmatprep.subr.mxu0 0.0
    %1884 = vmatpush1.msra.mxu0 0.0
    %1885 = vmatprep.subr.mxu0 0.0
    %1886 = vmatpush1.msra.mxu0 0.0
    %1887 = vmatprep.subr.mxu0 0.0
    %1888 = vmatpush1.msra.mxu0 0.0
    %1889 = vmatprep.subr.mxu0 0.0
    %1890 = vmatpush1.msra.mxu0 0.0
    %1891 = vmatprep.subr.mxu0 0.0
    %1892 = vmatpush1.msra.mxu0 0.0
    %1893 = vmatprep.subr.mxu0 0.0
    %1894 = vmatpush1.msra.mxu0 0.0
    %1895 = vmatprep.subr.mxu0 0.0
    %1896 = vmatpush1.msra.mxu0 0.0
    %1897 = vmatprep.mubr.f32.mxu0 0.0
    %v1898 = vand.u32 %v1528, 4294901760
    %1899 = vmatmul.mubr.f32.gmra.mrb[0].mxu0 %v1898
    %v1900 = vpop.f32.mrb[0].mxu0
    %v1901 = vadd.f32 %v1827, %v1900
    %v1902 = vpop.f32.mrb[0].mxu0
    %1903 = vdwg.mxu0
    %1904 = vmatprep.subr.mxu0 0.0
    %v1905 = vand.u32 %v1525, 4294901760
    %1906 = vmatpush1.msra.mxu0 %v1905
    %1907 = vmatprep.subr.mxu0 0.0
    %1908 = vmatpush1.msra.mxu0 0.0
    %1909 = vmatprep.subr.mxu0 0.0
    %1910 = vmatpush1.msra.mxu0 0.0
    %1911 = vmatprep.subr.mxu0 0.0
    %1912 = vmatpush1.msra.mxu0 0.0
    %1913 = vmatprep.subr.mxu0 0.0
    %1914 = vmatpush1.msra.mxu0 0.0
    %1915 = vmatprep.subr.mxu0 0.0
    %1916 = vmatpush1.msra.mxu0 0.0
    %1917 = vmatprep.subr.mxu0 0.0
    %1918 = vmatpush1.msra.mxu0 0.0
    %1919 = vmatprep.subr.mxu0 0.0
    %1920 = vmatpush1.msra.mxu0 0.0
    %1921 = vmatprep.subr.mxu0 0.0
    %1922 = vmatpush1.msra.mxu0 0.0
    %1923 = vmatprep.subr.mxu0 0.0
    %1924 = vmatpush1.msra.mxu0 0.0
    %1925 = vmatprep.subr.mxu0 0.0
    %1926 = vmatpush1.msra.mxu0 0.0
    %1927 = vmatprep.subr.mxu0 0.0
    %1928 = vmatpush1.msra.mxu0 0.0
    %1929 = vmatprep.subr.mxu0 0.0
    %1930 = vmatpush1.msra.mxu0 0.0
    %1931 = vmatprep.subr.mxu0 0.0
    %1932 = vmatpush1.msra.mxu0 0.0
    %1933 = vmatprep.subr.mxu0 0.0
    %1934 = vmatpush1.msra.mxu0 0.0
    %1935 = vmatprep.subr.mxu0 0.0
    %1936 = vmatpush1.msra.mxu0 0.0
    %1937 = vmatprep.subr.mxu0 0.0
    %1938 = vmatpush1.msra.mxu0 0.0
    %1939 = vmatprep.subr.mxu0 0.0
    %1940 = vmatpush1.msra.mxu0 0.0
    %1941 = vmatprep.subr.mxu0 0.0
    %1942 = vmatpush1.msra.mxu0 0.0
    %1943 = vmatprep.subr.mxu0 0.0
    %1944 = vmatpush1.msra.mxu0 0.0
    %1945 = vmatprep.subr.mxu0 0.0
    %1946 = vmatpush1.msra.mxu0 0.0
    %1947 = vmatprep.subr.mxu0 0.0
    %1948 = vmatpush1.msra.mxu0 0.0
    %1949 = vmatprep.subr.mxu0 0.0
    %1950 = vmatpush1.msra.mxu0 0.0
    %1951 = vmatprep.subr.mxu0 0.0
    %1952 = vmatpush1.msra.mxu0 0.0
    %1953 = vmatprep.subr.mxu0 0.0
    %1954 = vmatpush1.msra.mxu0 0.0
    %1955 = vmatprep.subr.mxu0 0.0
    %1956 = vmatpush1.msra.mxu0 0.0
    %1957 = vmatprep.subr.mxu0 0.0
    %1958 = vmatpush1.msra.mxu0 0.0
    %1959 = vmatprep.subr.mxu0 0.0
    %1960 = vmatpush1.msra.mxu0 0.0
    %1961 = vmatprep.subr.mxu0 0.0
    %1962 = vmatpush1.msra.mxu0 0.0
    %1963 = vmatprep.subr.mxu0 0.0
    %1964 = vmatpush1.msra.mxu0 0.0
    %1965 = vmatprep.subr.mxu0 0.0
    %1966 = vmatpush1.msra.mxu0 0.0
    %1967 = vmatprep.subr.mxu0 0.0
    %1968 = vmatpush1.msra.mxu0 0.0
    %1969 = vmatprep.mubr.f32.mxu0 0.0
    %v1970 = vand.u32 %v1528, 4294901760
    %1971 = vmatmul.mubr.f32.gmra.mrb[0].mxu0 %v1970
    %v1972 = vpop.f32.mrb[0].mxu0
    %v1973 = vadd.f32 %v1901, %v1972
    %v1974 = vpop.f32.mrb[0].mxu0
    %1975 = vdwg.mxu0
    %1976 = vrot.lane.b32.xlu0 %v592, 64
    %v1977 = vpop.permute.xlu0 %1976
    %v1980 = vsel %vm1501, %v1523, 0
    %1982 = vmatprep.subr.mxu0 0.0
    %v1983 = vand.u32 %v1977, 4294901760
    %1984 = vmatpush1.msra.mxu0 %v1983
    %1985 = vmatprep.subr.mxu0 0.0
    %1986 = vmatpush1.msra.mxu0 0.0
    %1987 = vmatprep.subr.mxu0 0.0
    %1988 = vmatpush1.msra.mxu0 0.0
    %1989 = vmatprep.subr.mxu0 0.0
    %1990 = vmatpush1.msra.mxu0 0.0
    %1991 = vmatprep.subr.mxu0 0.0
    %1992 = vmatpush1.msra.mxu0 0.0
    %1993 = vmatprep.subr.mxu0 0.0
    %1994 = vmatpush1.msra.mxu0 0.0
    %1995 = vmatprep.subr.mxu0 0.0
    %1996 = vmatpush1.msra.mxu0 0.0
    %1997 = vmatprep.subr.mxu0 0.0
    %1998 = vmatpush1.msra.mxu0 0.0
    %1999 = vmatprep.subr.mxu0 0.0
    %2000 = vmatpush1.msra.mxu0 0.0
    %2001 = vmatprep.subr.mxu0 0.0
    %2002 = vmatpush1.msra.mxu0 0.0
    %2003 = vmatprep.subr.mxu0 0.0
    %2004 = vmatpush1.msra.mxu0 0.0
    %2005 = vmatprep.subr.mxu0 0.0
    %2006 = vmatpush1.msra.mxu0 0.0
    %2007 = vmatprep.subr.mxu0 0.0
    %2008 = vmatpush1.msra.mxu0 0.0
    %2009 = vmatprep.subr.mxu0 0.0
    %2010 = vmatpush1.msra.mxu0 0.0
    %2011 = vmatprep.subr.mxu0 0.0
    %2012 = vmatpush1.msra.mxu0 0.0
    %2013 = vmatprep.subr.mxu0 0.0
    %2014 = vmatpush1.msra.mxu0 0.0
    %2015 = vmatprep.subr.mxu0 0.0
    %2016 = vmatpush1.msra.mxu0 0.0
    %2017 = vmatprep.subr.mxu0 0.0
    %2018 = vmatpush1.msra.mxu0 0.0
    %2019 = vmatprep.subr.mxu0 0.0
    %2020 = vmatpush1.msra.mxu0 0.0
    %2021 = vmatprep.subr.mxu0 0.0
    %2022 = vmatpush1.msra.mxu0 0.0
    %2023 = vmatprep.subr.mxu0 0.0
    %2024 = vmatpush1.msra.mxu0 0.0
    %2025 = vmatprep.subr.mxu0 0.0
    %2026 = vmatpush1.msra.mxu0 0.0
    %2027 = vmatprep.subr.mxu0 0.0
    %2028 = vmatpush1.msra.mxu0 0.0
    %2029 = vmatprep.subr.mxu0 0.0
    %2030 = vmatpush1.msra.mxu0 0.0
    %2031 = vmatprep.subr.mxu0 0.0
    %2032 = vmatpush1.msra.mxu0 0.0
    %2033 = vmatprep.subr.mxu0 0.0
    %2034 = vmatpush1.msra.mxu0 0.0
    %2035 = vmatprep.subr.mxu0 0.0
    %2036 = vmatpush1.msra.mxu0 0.0
    %2037 = vmatprep.subr.mxu0 0.0
    %2038 = vmatpush1.msra.mxu0 0.0
    %2039 = vmatprep.subr.mxu0 0.0
    %2040 = vmatpush1.msra.mxu0 0.0
    %2041 = vmatprep.subr.mxu0 0.0
    %2042 = vmatpush1.msra.mxu0 0.0
    %2043 = vmatprep.subr.mxu0 0.0
    %2044 = vmatpush1.msra.mxu0 0.0
    %2045 = vmatprep.subr.mxu0 0.0
    %2046 = vmatpush1.msra.mxu0 0.0
    %2047 = vmatprep.mubr.f32.mxu0 0.0
    %v2048 = vand.u32 %v1980, 4294901760
    %v2049 = vsub.f32 %v1980, %v2048
    %v2050 = vand.u32 %v2049, 4294901760
    %v2051 = vsub.f32 %v2049, %v2050
    %v2052 = vand.u32 %v2051, 4294901760
    %2053 = vmatmul.mubr.f32.gmra.mrb[0].mxu0 %v2052
    %v2054 = vpop.f32.mrb[0].mxu0
    %v2055 = vadd.f32 0.0, %v2054
    %v2056 = vpop.f32.mrb[0].mxu0
    %2057 = vdwg.mxu0
    %2058 = vmatprep.subr.mxu0 0.0
    %v2059 = vand.u32 %v1977, 4294901760
    %v2060 = vsub.f32 %v1977, %v2059
    %v2061 = vand.u32 %v2060, 4294901760
    %v2062 = vsub.f32 %v2060, %v2061
    %v2063 = vand.u32 %v2062, 4294901760
    %2064 = vmatpush1.msra.mxu0 %v2063
    %2065 = vmatprep.subr.mxu0 0.0
    %2066 = vmatpush1.msra.mxu0 0.0
    %2067 = vmatprep.subr.mxu0 0.0
    %2068 = vmatpush1.msra.mxu0 0.0
    %2069 = vmatprep.subr.mxu0 0.0
    %2070 = vmatpush1.msra.mxu0 0.0
    %2071 = vmatprep.subr.mxu0 0.0
    %2072 = vmatpush1.msra.mxu0 0.0
    %2073 = vmatprep.subr.mxu0 0.0
    %2074 = vmatpush1.msra.mxu0 0.0
    %2075 = vmatprep.subr.mxu0 0.0
    %2076 = vmatpush1.msra.mxu0 0.0
    %2077 = vmatprep.subr.mxu0 0.0
    %2078 = vmatpush1.msra.mxu0 0.0
    %2079 = vmatprep.subr.mxu0 0.0
    %2080 = vmatpush1.msra.mxu0 0.0
    %2081 = vmatprep.subr.mxu0 0.0
    %2082 = vmatpush1.msra.mxu0 0.0
    %2083 = vmatprep.subr.mxu0 0.0
    %2084 = vmatpush1.msra.mxu0 0.0
    %2085 = vmatprep.subr.mxu0 0.0
    %2086 = vmatpush1.msra.mxu0 0.0
    %2087 = vmatprep.subr.mxu0 0.0
    %2088 = vmatpush1.msra.mxu0 0.0
    %2089 = vmatprep.subr.mxu0 0.0
    %2090 = vmatpush1.msra.mxu0 0.0
    %2091 = vmatprep.subr.mxu0 0.0
    %2092 = vmatpush1.msra.mxu0 0.0
    %2093 = vmatprep.subr.mxu0 0.0
    %2094 = vmatpush1.msra.mxu0 0.0
    %2095 = vmatprep.subr.mxu0 0.0
    %2096 = vmatpush1.msra.mxu0 0.0
    %2097 = vmatprep.subr.mxu0 0.0
    %2098 = vmatpush1.msra.mxu0 0.0
    %2099 = vmatprep.subr.mxu0 0.0
    %2100 = vmatpush1.msra.mxu0 0.0
    %2101 = vmatprep.subr.mxu0 0.0
    %2102 = vmatpush1.msra.mxu0 0.0
    %2103 = vmatprep.subr.mxu0 0.0
    %2104 = vmatpush1.msra.mxu0 0.0
    %2105 = vmatprep.subr.mxu0 0.0
    %2106 = vmatpush1.msra.mxu0 0.0
    %2107 = vmatprep.subr.mxu0 0.0
    %2108 = vmatpush1.msra.mxu0 0.0
    %2109 = vmatprep.subr.mxu0 0.0
    %2110 = vmatpush1.msra.mxu0 0.0
    %2111 = vmatprep.subr.mxu0 0.0
    %2112 = vmatpush1.msra.mxu0 0.0
    %2113 = vmatprep.subr.mxu0 0.0
    %2114 = vmatpush1.msra.mxu0 0.0
    %2115 = vmatprep.subr.mxu0 0.0
    %2116 = vmatpush1.msra.mxu0 0.0
    %2117 = vmatprep.subr.mxu0 0.0
    %2118 = vmatpush1.msra.mxu0 0.0
    %2119 = vmatprep.subr.mxu0 0.0
    %2120 = vmatpush1.msra.mxu0 0.0
    %2121 = vmatprep.subr.mxu0 0.0
    %2122 = vmatpush1.msra.mxu0 0.0
    %2123 = vmatprep.subr.mxu0 0.0
    %2124 = vmatpush1.msra.mxu0 0.0
    %2125 = vmatprep.subr.mxu0 0.0
    %2126 = vmatpush1.msra.mxu0 0.0
    %2127 = vmatprep.mubr.f32.mxu0 0.0
    %v2128 = vand.u32 %v1980, 4294901760
    %2129 = vmatmul.mubr.f32.gmra.mrb[0].mxu0 %v2128
    %v2130 = vpop.f32.mrb[0].mxu0
    %v2131 = vadd.f32 %v2055, %v2130
    %v2132 = vpop.f32.mrb[0].mxu0
    %2133 = vdwg.mxu0
    %2134 = vmatprep.subr.mxu0 0.0
    %v2135 = vand.u32 %v1977, 4294901760
    %v2136 = vsub.f32 %v1977, %v2135
    %2137 = vmatpush1.msra.mxu0 %v2136
    %2138 = vmatprep.subr.mxu0 0.0
    %2139 = vmatpush1.msra.mxu0 0.0
    %2140 = vmatprep.subr.mxu0 0.0
    %2141 = vmatpush1.msra.mxu0 0.0
    %2142 = vmatprep.subr.mxu0 0.0
    %2143 = vmatpush1.msra.mxu0 0.0
    %2144 = vmatprep.subr.mxu0 0.0
    %2145 = vmatpush1.msra.mxu0 0.0
    %2146 = vmatprep.subr.mxu0 0.0
    %2147 = vmatpush1.msra.mxu0 0.0
    %2148 = vmatprep.subr.mxu0 0.0
    %2149 = vmatpush1.msra.mxu0 0.0
    %2150 = vmatprep.subr.mxu0 0.0
    %2151 = vmatpush1.msra.mxu0 0.0
    %2152 = vmatprep.subr.mxu0 0.0
    %2153 = vmatpush1.msra.mxu0 0.0
    %2154 = vmatprep.subr.mxu0 0.0
    %2155 = vmatpush1.msra.mxu0 0.0
    %2156 = vmatprep.subr.mxu0 0.0
    %2157 = vmatpush1.msra.mxu0 0.0
    %2158 = vmatprep.subr.mxu0 0.0
    %2159 = vmatpush1.msra.mxu0 0.0
    %2160 = vmatprep.subr.mxu0 0.0
    %2161 = vmatpush1.msra.mxu0 0.0
    %2162 = vmatprep.subr.mxu0 0.0
    %2163 = vmatpush1.msra.mxu0 0.0
    %2164 = vmatprep.subr.mxu0 0.0
    %2165 = vmatpush1.msra.mxu0 0.0
    %2166 = vmatprep.subr.mxu0 0.0
    %2167 = vmatpush1.msra.mxu0 0.0
    %2168 = vmatprep.subr.mxu0 0.0
    %2169 = vmatpush1.msra.mxu0 0.0
    %2170 = vmatprep.subr.mxu0 0.0
    %2171 = vmatpush1.msra.mxu0 0.0
    %2172 = vmatprep.subr.mxu0 0.0
    %2173 = vmatpush1.msra.mxu0 0.0
    %2174 = vmatprep.subr.mxu0 0.0
    %2175 = vmatpush1.msra.mxu0 0.0
    %2176 = vmatprep.subr.mxu0 0.0
    %2177 = vmatpush1.msra.mxu0 0.0
    %2178 = vmatprep.subr.mxu0 0.0
    %2179 = vmatpush1.msra.mxu0 0.0
    %2180 = vmatprep.subr.mxu0 0.0
    %2181 = vmatpush1.msra.mxu0 0.0
    %2182 = vmatprep.subr.mxu0 0.0
    %2183 = vmatpush1.msra.mxu0 0.0
    %2184 = vmatprep.subr.mxu0 0.0
    %2185 = vmatpush1.msra.mxu0 0.0
    %2186 = vmatprep.subr.mxu0 0.0
    %2187 = vmatpush1.msra.mxu0 0.0
    %2188 = vmatprep.subr.mxu0 0.0
    %2189 = vmatpush1.msra.mxu0 0.0
    %2190 = vmatprep.subr.mxu0 0.0
    %2191 = vmatpush1.msra.mxu0 0.0
    %2192 = vmatprep.subr.mxu0 0.0
    %2193 = vmatpush1.msra.mxu0 0.0
    %2194 = vmatprep.subr.mxu0 0.0
    %2195 = vmatpush1.msra.mxu0 0.0
    %2196 = vmatprep.subr.mxu0 0.0
    %2197 = vmatpush1.msra.mxu0 0.0
    %2198 = vmatprep.subr.mxu0 0.0
    %2199 = vmatpush1.msra.mxu0 0.0
    %2200 = vmatprep.mubr.f32.mxu0 0.0
    %v2201 = vand.u32 %v1980, 4294901760
    %v2202 = vsub.f32 %v1980, %v2201
    %2203 = vmatmul.mubr.f32.gmra.mrb[0].mxu0 %v2202
    %v2204 = vpop.f32.mrb[0].mxu0
    %v2205 = vadd.f32 %v2131, %v2204
    %v2206 = vpop.f32.mrb[0].mxu0
    %2207 = vdwg.mxu0
    %2208 = vmatprep.subr.mxu0 0.0
    %v2209 = vand.u32 %v1977, 4294901760
    %2210 = vmatpush1.msra.mxu0 %v2209
    %2211 = vmatprep.subr.mxu0 0.0
    %2212 = vmatpush1.msra.mxu0 0.0
    %2213 = vmatprep.subr.mxu0 0.0
    %2214 = vmatpush1.msra.mxu0 0.0
    %2215 = vmatprep.subr.mxu0 0.0
    %2216 = vmatpush1.msra.mxu0 0.0
    %2217 = vmatprep.subr.mxu0 0.0
    %2218 = vmatpush1.msra.mxu0 0.0
    %2219 = vmatprep.subr.mxu0 0.0
    %2220 = vmatpush1.msra.mxu0 0.0
    %2221 = vmatprep.subr.mxu0 0.0
    %2222 = vmatpush1.msra.mxu0 0.0
    %2223 = vmatprep.subr.mxu0 0.0
    %2224 = vmatpush1.msra.mxu0 0.0
    %2225 = vmatprep.subr.mxu0 0.0
    %2226 = vmatpush1.msra.mxu0 0.0
    %2227 = vmatprep.subr.mxu0 0.0
    %2228 = vmatpush1.msra.mxu0 0.0
    %2229 = vmatprep.subr.mxu0 0.0
    %2230 = vmatpush1.msra.mxu0 0.0
    %2231 = vmatprep.subr.mxu0 0.0
    %2232 = vmatpush1.msra.mxu0 0.0
    %2233 = vmatprep.subr.mxu0 0.0
    %2234 = vmatpush1.msra.mxu0 0.0
    %2235 = vmatprep.subr.mxu0 0.0
    %2236 = vmatpush1.msra.mxu0 0.0
    %2237 = vmatprep.subr.mxu0 0.0
    %2238 = vmatpush1.msra.mxu0 0.0
    %2239 = vmatprep.subr.mxu0 0.0
    %2240 = vmatpush1.msra.mxu0 0.0
    %2241 = vmatprep.subr.mxu0 0.0
    %2242 = vmatpush1.msra.mxu0 0.0
    %2243 = vmatprep.subr.mxu0 0.0
    %2244 = vmatpush1.msra.mxu0 0.0
    %2245 = vmatprep.subr.mxu0 0.0
    %2246 = vmatpush1.msra.mxu0 0.0
    %2247 = vmatprep.subr.mxu0 0.0
    %2248 = vmatpush1.msra.mxu0 0.0
    %2249 = vmatprep.subr.mxu0 0.0
    %2250 = vmatpush1.msra.mxu0 0.0
    %2251 = vmatprep.subr.mxu0 0.0
    %2252 = vmatpush1.msra.mxu0 0.0
    %2253 = vmatprep.subr.mxu0 0.0
    %2254 = vmatpush1.msra.mxu0 0.0
    %2255 = vmatprep.subr.mxu0 0.0
    %2256 = vmatpush1.msra.mxu0 0.0
    %2257 = vmatprep.subr.mxu0 0.0
    %2258 = vmatpush1.msra.mxu0 0.0
    %2259 = vmatprep.subr.mxu0 0.0
    %2260 = vmatpush1.msra.mxu0 0.0
    %2261 = vmatprep.subr.mxu0 0.0
    %2262 = vmatpush1.msra.mxu0 0.0
    %2263 = vmatprep.subr.mxu0 0.0
    %2264 = vmatpush1.msra.mxu0 0.0
    %2265 = vmatprep.subr.mxu0 0.0
    %2266 = vmatpush1.msra.mxu0 0.0
    %2267 = vmatprep.subr.mxu0 0.0
    %2268 = vmatpush1.msra.mxu0 0.0
    %2269 = vmatprep.subr.mxu0 0.0
    %2270 = vmatpush1.msra.mxu0 0.0
    %2271 = vmatprep.subr.mxu0 0.0
    %2272 = vmatpush1.msra.mxu0 0.0
    %2273 = vmatprep.mubr.f32.mxu0 0.0
    %v2274 = vand.u32 %v1980, 4294901760
    %v2275 = vsub.f32 %v1980, %v2274
    %v2276 = vand.u32 %v2275, 4294901760
    %2277 = vmatmul.mubr.f32.gmra.mrb[0].mxu0 %v2276
    %v2278 = vpop.f32.mrb[0].mxu0
    %v2279 = vadd.f32 %v2205, %v2278
    %v2280 = vpop.f32.mrb[0].mxu0
    %2281 = vdwg.mxu0
    %2282 = vmatprep.subr.mxu0 0.0
    %v2283 = vand.u32 %v1977, 4294901760
    %v2284 = vsub.f32 %v1977, %v2283
    %v2285 = vand.u32 %v2284, 4294901760
    %2286 = vmatpush1.msra.mxu0 %v2285
    %2287 = vmatprep.subr.mxu0 0.0
    %2288 = vmatpush1.msra.mxu0 0.0
    %2289 = vmatprep.subr.mxu0 0.0
    %2290 = vmatpush1.msra.mxu0 0.0
    %2291 = vmatprep.subr.mxu0 0.0
    %2292 = vmatpush1.msra.mxu0 0.0
    %2293 = vmatprep.subr.mxu0 0.0
    %2294 = vmatpush1.msra.mxu0 0.0
    %2295 = vmatprep.subr.mxu0 0.0
    %2296 = vmatpush1.msra.mxu0 0.0
    %2297 = vmatprep.subr.mxu0 0.0
    %2298 = vmatpush1.msra.mxu0 0.0
    %2299 = vmatprep.subr.mxu0 0.0
    %2300 = vmatpush1.msra.mxu0 0.0
    %2301 = vmatprep.subr.mxu0 0.0
    %2302 = vmatpush1.msra.mxu0 0.0
    %2303 = vmatprep.subr.mxu0 0.0
    %2304 = vmatpush1.msra.mxu0 0.0
    %2305 = vmatprep.subr.mxu0 0.0
    %2306 = vmatpush1.msra.mxu0 0.0
    %2307 = vmatprep.subr.mxu0 0.0
    %2308 = vmatpush1.msra.mxu0 0.0
    %2309 = vmatprep.subr.mxu0 0.0
    %2310 = vmatpush1.msra.mxu0 0.0
    %2311 = vmatprep.subr.mxu0 0.0
    %2312 = vmatpush1.msra.mxu0 0.0
    %2313 = vmatprep.subr.mxu0 0.0
    %2314 = vmatpush1.msra.mxu0 0.0
    %2315 = vmatprep.subr.mxu0 0.0
    %2316 = vmatpush1.msra.mxu0 0.0
    %2317 = vmatprep.subr.mxu0 0.0
    %2318 = vmatpush1.msra.mxu0 0.0
    %2319 = vmatprep.subr.mxu0 0.0
    %2320 = vmatpush1.msra.mxu0 0.0
    %2321 = vmatprep.subr.mxu0 0.0
    %2322 = vmatpush1.msra.mxu0 0.0
    %2323 = vmatprep.subr.mxu0 0.0
    %2324 = vmatpush1.msra.mxu0 0.0
    %2325 = vmatprep.subr.mxu0 0.0
    %2326 = vmatpush1.msra.mxu0 0.0
    %2327 = vmatprep.subr.mxu0 0.0
    %2328 = vmatpush1.msra.mxu0 0.0
    %2329 = vmatprep.subr.mxu0 0.0
    %2330 = vmatpush1.msra.mxu0 0.0
    %2331 = vmatprep.subr.mxu0 0.0
    %2332 = vmatpush1.msra.mxu0 0.0
    %2333 = vmatprep.subr.mxu0 0.0
    %2334 = vmatpush1.msra.mxu0 0.0
    %2335 = vmatprep.subr.mxu0 0.0
    %2336 = vmatpush1.msra.mxu0 0.0
    %2337 = vmatprep.subr.mxu0 0.0
    %2338 = vmatpush1.msra.mxu0 0.0
    %2339 = vmatprep.subr.mxu0 0.0
    %2340 = vmatpush1.msra.mxu0 0.0
    %2341 = vmatprep.subr.mxu0 0.0
    %2342 = vmatpush1.msra.mxu0 0.0
    %2343 = vmatprep.subr.mxu0 0.0
    %2344 = vmatpush1.msra.mxu0 0.0
    %2345 = vmatprep.subr.mxu0 0.0
    %2346 = vmatpush1.msra.mxu0 0.0
    %2347 = vmatprep.subr.mxu0 0.0
    %2348 = vmatpush1.msra.mxu0 0.0
    %2349 = vmatprep.mubr.f32.mxu0 0.0
    %v2350 = vand.u32 %v1980, 4294901760
    %2351 = vmatmul.mubr.f32.gmra.mrb[0].mxu0 %v2350
    %v2352 = vpop.f32.mrb[0].mxu0
    %v2353 = vadd.f32 %v2279, %v2352
    %v2354 = vpop.f32.mrb[0].mxu0
    %2355 = vdwg.mxu0
    %2356 = vmatprep.subr.mxu0 0.0
    %v2357 = vand.u32 %v1977, 4294901760
    %2358 = vmatpush1.msra.mxu0 %v2357
    %2359 = vmatprep.subr.mxu0 0.0
    %2360 = vmatpush1.msra.mxu0 0.0
    %2361 = vmatprep.subr.mxu0 0.0
    %2362 = vmatpush1.msra.mxu0 0.0
    %2363 = vmatprep.subr.mxu0 0.0
    %2364 = vmatpush1.msra.mxu0 0.0
    %2365 = vmatprep.subr.mxu0 0.0
    %2366 = vmatpush1.msra.mxu0 0.0
    %2367 = vmatprep.subr.mxu0 0.0
    %2368 = vmatpush1.msra.mxu0 0.0
    %2369 = vmatprep.subr.mxu0 0.0
    %2370 = vmatpush1.msra.mxu0 0.0
    %2371 = vmatprep.subr.mxu0 0.0
    %2372 = vmatpush1.msra.mxu0 0.0
    %2373 = vmatprep.subr.mxu0 0.0
    %2374 = vmatpush1.msra.mxu0 0.0
    %2375 = vmatprep.subr.mxu0 0.0
    %2376 = vmatpush1.msra.mxu0 0.0
    %2377 = vmatprep.subr.mxu0 0.0
    %2378 = vmatpush1.msra.mxu0 0.0
    %2379 = vmatprep.subr.mxu0 0.0
    %2380 = vmatpush1.msra.mxu0 0.0
    %2381 = vmatprep.subr.mxu0 0.0
    %2382 = vmatpush1.msra.mxu0 0.0
    %2383 = vmatprep.subr.mxu0 0.0
    %2384 = vmatpush1.msra.mxu0 0.0
    %2385 = vmatprep.subr.mxu0 0.0
    %2386 = vmatpush1.msra.mxu0 0.0
    %2387 = vmatprep.subr.mxu0 0.0
    %2388 = vmatpush1.msra.mxu0 0.0
    %2389 = vmatprep.subr.mxu0 0.0
    %2390 = vmatpush1.msra.mxu0 0.0
    %2391 = vmatprep.subr.mxu0 0.0
    %2392 = vmatpush1.msra.mxu0 0.0
    %2393 = vmatprep.subr.mxu0 0.0
    %2394 = vmatpush1.msra.mxu0 0.0
    %2395 = vmatprep.subr.mxu0 0.0
    %2396 = vmatpush1.msra.mxu0 0.0
    %2397 = vmatprep.subr.mxu0 0.0
    %2398 = vmatpush1.msra.mxu0 0.0
    %2399 = vmatprep.subr.mxu0 0.0
    %2400 = vmatpush1.msra.mxu0 0.0
    %2401 = vmatprep.subr.mxu0 0.0
    %2402 = vmatpush1.msra.mxu0 0.0
    %2403 = vmatprep.subr.mxu0 0.0
    %2404 = vmatpush1.msra.mxu0 0.0
    %2405 = vmatprep.subr.mxu0 0.0
    %2406 = vmatpush1.msra.mxu0 0.0
    %2407 = vmatprep.subr.mxu0 0.0
    %2408 = vmatpush1.msra.mxu0 0.0
    %2409 = vmatprep.subr.mxu0 0.0
    %2410 = vmatpush1.msra.mxu0 0.0
    %2411 = vmatprep.subr.mxu0 0.0
    %2412 = vmatpush1.msra.mxu0 0.0
    %2413 = vmatprep.subr.mxu0 0.0
    %2414 = vmatpush1.msra.mxu0 0.0
    %2415 = vmatprep.subr.mxu0 0.0
    %2416 = vmatpush1.msra.mxu0 0.0
    %2417 = vmatprep.subr.mxu0 0.0
    %2418 = vmatpush1.msra.mxu0 0.0
    %2419 = vmatprep.subr.mxu0 0.0
    %2420 = vmatpush1.msra.mxu0 0.0
    %2421 = vmatprep.mubr.f32.mxu0 0.0
    %v2422 = vand.u32 %v1980, 4294901760
    %2423 = vmatmul.mubr.f32.gmra.mrb[0].mxu0 %v2422
    %v2424 = vpop.f32.mrb[0].mxu0
    %v2425 = vadd.f32 %v2353, %v2424
    %v2426 = vpop.f32.mrb[0].mxu0
    %2427 = vdwg.mxu0
    %s2428 = sld [smem:[#allocation2]]
    %v2429 = vstv %s2428
    %v2430 = vmul.f32 %v2429, %v1973
    %v2431 = vmul.f32 %v2429, %v2425
    %v2432 = vadd.f32 %v2430, %v47
    %v2433 = vadd.f32 %v2431, %v48
    %2434 = vst.msk [vmem:[#allocation8] sm:$0xff] %vm60, %v2432
    %2435 = vst.msk [vmem:[#allocation8 + $0x8] sm:$0xff] %vm60, %v2433
    // Predicated region
    $region26: #{tpu_custom_call.1} parent=1 // pred_check
      _
    $region27: #{tpu_custom_call.1} parent=1 // pred_check_branch
      %2437 = sbr.rel (0) target = $region29
    $region28: #{tpu_custom_call.1} parent=1 // pred_region
      %s2439 = ssub.s32 256, 256
      %2440 = vsyncadd [#allocation5], %s2439
      %s2441 = sshll.u32 [#allocation8], 4
      %s2442 = int_to_ptr.vmem [resolvable:$true] %s2441
      %2447 = dma.vmem_to_hbm [thread:$0]  %s2442, 256, %s4, [#allocation5], 128, 128, 8
    $region29: #{tpu_custom_call.1} parent=1 // pred_fallthru
      _
    // Predicated region
    $region30: #{tpu_custom_call.1} parent=1 // pred_check
      _
    $region31: #{tpu_custom_call.1} parent=1 // pred_check_branch
      %2449 = sbr.rel (0) target = $region33
    $region32: #{tpu_custom_call.1} parent=1 // pred_region
      %2450 = dma.done [#allocation5], 256
    $region33: #{tpu_custom_call.1} parent=1 // pred_fallthru
      _
    %2451 = vsyncpa [#allocation4], 1
    %2452 = vsyncpa [#allocation7], 1
    %2453 = vsyncpa [#allocation5], 1

</llo_original>
